<compile_context>
chip_gen: v7x
topology: tpu7x:2x2x1
jax: 0.10.0
libtpu: 0.0.40
codegen_flags: <defaults>
</compile_context>

<pallas_src>
import functools

import jax
import jax.numpy as jnp
from jax import lax
from jax.experimental import pallas as pl
from jax.experimental.pallas import tpu as pltpu

_LANE = 128


# ----------------------------------------------------------------------------
# Small helpers
# ----------------------------------------------------------------------------
def _round_up(n, m):
    return ((n + m - 1) // m) * m


def _sublane(dtype):
    # Rows per sublane-tile for the packed dtype.
    return {4: 8, 2: 16, 1: 32}.get(jnp.dtype(dtype).itemsize, 8)


def _pad2(a, rows, cols):
    pr, pc = rows - a.shape[0], cols - a.shape[1]
    if pr == 0 and pc == 0:
        return a
    return jnp.pad(a, ((0, pr), (0, pc)))


def _pick_vmem_limit_bytes():
    # Raise the scoped VMEM limit above the small defaults, leaving ~8 MiB of
    # headroom under physical capacity (128 MiB v5e/v6e, 64 MiB per TC v7x).
    try:
        cap = pltpu.get_tpu_info().vmem_capacity_bytes
        return int(min(cap - (8 << 20), 100 << 20))
    except Exception:
        # Conservative fallback that still fits v7x's 64 MiB/TC with headroom.
        return 48 << 20


_VMEM_LIMIT = _pick_vmem_limit_bytes()


def _check_buffered():
    # Import-time capability check (no runtime probe): does this JAX accept
    # pipeline_mode=pl.Buffered(1) on a BlockSpec?
    if not hasattr(pl, "Buffered"):
        return False
    try:
        pl.BlockSpec((8, _LANE), lambda i: (0, 0), pipeline_mode=pl.Buffered(1))
        return True
    except Exception:
        return False


_HAS_BUFFERED = _check_buffered()


# ----------------------------------------------------------------------------
# Kernels
# ----------------------------------------------------------------------------
def _mlp_fused_kernel(x_ref, w1_ref, b1_ref, w2_ref, b2_ref, o_ref, *, precision):
    """Both weight matrices resident in VMEM; one batch tile per grid step."""
    x = x_ref[...]
    h = jnp.dot(x, w1_ref[...], preferred_element_type=jnp.float32,
                precision=precision)
    h = jnp.maximum(h + b1_ref[...].astype(jnp.float32), 0.0)
    o = jnp.dot(h.astype(w2_ref.dtype), w2_ref[...],
                preferred_element_type=jnp.float32, precision=precision)
    o_ref[...] = (o + b2_ref[...].astype(jnp.float32)).astype(o_ref.dtype)


def _mlp_ktiled_kernel(x_ref, w1_ref, b1_ref, w2_ref, b2_ref, o_ref, acc_ref,
                       *, precision):
    """Hidden dim chunked over grid axis 1: W1 column-chunk + W2 row-chunk are
    streamed, x tile stays resident, fc2 partial products accumulate in f32.
    Each hidden unit depends only on its own W1 column, so bias+ReLU per chunk
    is exact."""
    k = pl.program_id(1)

    @pl.when(k == 0)
    def _init():
        acc_ref[...] = jnp.zeros_like(acc_ref)

    h = jnp.dot(x_ref[...], w1_ref[...], preferred_element_type=jnp.float32,
                precision=precision)
    h = jnp.maximum(h + b1_ref[...].astype(jnp.float32), 0.0)
    # TODO(synk): on v6e with bf16 weights and small d_out, further chunk the
    # h->bf16 cast + dot inside this step (unrolled lax.fori_loop) so the VPU
    # cast of chunk i overlaps the MXU work of chunk i-1.
    acc_ref[...] += jnp.dot(h.astype(w2_ref.dtype), w2_ref[...],
                            preferred_element_type=jnp.float32,
                            precision=precision)

    @pl.when(k == pl.num_programs(1) - 1)
    def _finalize():
        o_ref[...] = (acc_ref[...] + b2_ref[...].astype(jnp.float32)
                      ).astype(o_ref.dtype)


# ----------------------------------------------------------------------------
# Jitted end-to-end forward (pad x -> pallas_call -> slice), single dispatch.
# ----------------------------------------------------------------------------
@functools.partial(
    jax.jit, static_argnames=("d_out", "block_b", "k_chunk", "hi_precision"))
def _mlp_forward_padded(x, w1p, b1p, w2p, b2p, *, d_out, block_b, k_chunk,
                        hi_precision):
    B, d_in = x.shape
    d_in_p, d_hid_p = w1p.shape
    d_out_p = w2p.shape[1]

    x = x.astype(w1p.dtype)
    Bp = _round_up(B, block_b)
    if Bp != B or d_in_p != d_in:
        x = jnp.pad(x, ((0, Bp - B), (0, d_in_p - d_in)))

    nb = Bp // block_b
    nk = d_hid_p // k_chunk
    precision = lax.Precision.HIGHEST if hi_precision else None

    flops = 2 * Bp * d_in_p * d_hid_p + 2 * Bp * d_hid_p * d_out_p
    bytes_accessed = sum(int(a.size) * a.dtype.itemsize
                         for a in (x, w1p, b1p, w2p, b2p))
    bytes_accessed += Bp * d_out_p * x.dtype.itemsize
    cost = pl.CostEstimate(flops=flops, transcendentals=0,
                           bytes_accessed=bytes_accessed)

    # Constant-index (resident) blocks: single-buffer when supported to halve
    # their VMEM footprint (matters most on v7x's 64 MiB/TC VMEM).
    resident = {"pipeline_mode": pl.Buffered(1)} if _HAS_BUFFERED else {}

    if nk == 1:
        out = pl.pallas_call(
            functools.partial(_mlp_fused_kernel, precision=precision),
            out_shape=jax.ShapeDtypeStruct((Bp, d_out_p), x.dtype),
            grid_spec=pltpu.PrefetchScalarGridSpec(
                num_scalar_prefetch=0,
                grid=(nb,),
                in_specs=[
                    pl.BlockSpec((block_b, d_in_p), lambda i: (i, 0)),
                    pl.BlockSpec((d_in_p, d_hid_p), lambda i: (0, 0), **resident),
                    pl.BlockSpec((1, d_hid_p), lambda i: (0, 0), **resident),
                    pl.BlockSpec((d_hid_p, d_out_p), lambda i: (0, 0), **resident),
                    pl.BlockSpec((1, d_out_p), lambda i: (0, 0), **resident),
                ],
                out_specs=pl.BlockSpec((block_b, d_out_p), lambda i: (i, 0)),
            ),
            compiler_params=pltpu.CompilerParams(
                dimension_semantics=("parallel",),
                vmem_limit_bytes=_VMEM_LIMIT),
            cost_estimate=cost,
        )(x, w1p, b1p, w2p, b2p)
    else:
        out = pl.pallas_call(
            functools.partial(_mlp_ktiled_kernel, precision=precision),
            out_shape=jax.ShapeDtypeStruct((Bp, d_out_p), x.dtype),
            grid_spec=pltpu.PrefetchScalarGridSpec(
                num_scalar_prefetch=0,
                grid=(nb, nk),
                in_specs=[
                    pl.BlockSpec((block_b, d_in_p), lambda i, k: (i, 0)),
                    pl.BlockSpec((d_in_p, k_chunk), lambda i, k: (0, k)),
                    pl.BlockSpec((1, k_chunk), lambda i, k: (0, k)),
                    pl.BlockSpec((k_chunk, d_out_p), lambda i, k: (k, 0)),
                    pl.BlockSpec((1, d_out_p), lambda i, k: (0, 0), **resident),
                ],
                out_specs=pl.BlockSpec((block_b, d_out_p), lambda i, k: (i, 0)),
                scratch_shapes=[pltpu.VMEM((block_b, d_out_p), jnp.float32)],
            ),
            compiler_params=pltpu.CompilerParams(
                dimension_semantics=("parallel", "arbitrary"),
                vmem_limit_bytes=_VMEM_LIMIT),
            cost_estimate=cost,
        )(x, w1p, b1p, w2p, b2p)

    return out[:B, :d_out]


# ----------------------------------------------------------------------------
# Public module: pads weights ONCE at construction, picks tiling per batch.
# ----------------------------------------------------------------------------
class PallasMLP:
    """Linear -> ReLU -> Linear.

    w1: [d_in, d_hid] (pre-transposed vs torch's [out, in]); b1: [d_hid];
    w2: [d_hid, d_out]; b2: [d_out].
    compute_dtype=jnp.bfloat16 enables the MXU-native bf16 path (f32 accum);
    note the hidden activation is cast to bf16 before fc2 (precision trade).
    """

    def __init__(self, w1, b1, w2, b2, *, compute_dtype=None):
        self.d_in, self.d_hid = w1.shape
        self.d_out = w2.shape[1]
        if compute_dtype is not None:
            w1, b1, w2, b2 = (a.astype(compute_dtype) for a in (w1, b1, w2, b2))

        self._d_in_p = _round_up(self.d_in, _LANE)
        self._d_hid_p = _round_up(self.d_hid, _LANE)
        self._d_out_p = _round_up(self.d_out, _LANE)

        # Pad once (zero rows/cols contribute exactly 0); cached on device.
        self.w1p = _pad2(w1, self._d_in_p, self._d_hid_p)
        self.b1p = _pad2(b1.reshape(1, -1), 1, self._d_hid_p)
        self.w2p = _pad2(w2, self._d_hid_p, self._d_out_p)
        self.b2p = _pad2(b2.reshape(1, -1), 1, self._d_out_p)

    # -- approximate VMEM footprint for a tiling choice ----------------------
    def _vmem_bytes(self, bb, k_chunk, itemsize):
        wbuf = 1 if _HAS_BUFFERED else 2              # resident blocks
        chunked = k_chunk < self._d_hid_p
        kbuf = 2 if chunked else wbuf                 # streamed chunks: 2-deep
        total = kbuf * (self._d_in_p * k_chunk + k_chunk * self._d_out_p
                        + k_chunk) * itemsize         # W1 chunk, W2 chunk, b1
        total += wbuf * self._d_out_p * itemsize      # b2
        total += 2 * bb * self._d_in_p * itemsize     # x tiles
        total += 2 * bb * self._d_out_p * itemsize    # out tiles
        total += bb * k_chunk * 4                     # f32 hidden temp
        if chunked:
            total += bb * self._d_out_p * 4           # f32 accumulator scratch
        return total

    def _choose_tiling(self, B, dtype, force_k_chunk=None):
        sub = _sublane(dtype)
        itemsize = jnp.dtype(dtype).itemsize

        # Batch tile adaptive to feature size (amortize per-grid-step cost).
        max_feat = max(self._d_in_p, self._d_hid_p, self._d_out_p)
        if max_feat <= 512:
            target_bb = 1024
        elif max_feat <= 2048:
            target_bb = 512
        else:
            target_bb = 256
        bb = max(sub, min(target_bb, _round_up(B, sub)))

        # v7x megacore: keep >=2 batch grid steps for moderate/large B so both
        # TensorCores get work (harmless on single-TC v5e/v6e).
        if _round_up(B, bb) // bb < 2 and B >= 2 * _LANE:
            bb = max(sub, _round_up(pl.cdiv(B, 2), sub))

        budget = int(0.75 * _VMEM_LIMIT)
        if force_k_chunk is not None:
            k_chunk = force_k_chunk
        elif self._vmem_bytes(bb, self._d_hid_p, itemsize) <= budget:
            k_chunk = self._d_hid_p                   # fused, weights resident
        else:
            k_chunk = 128
            for c in (2048, 1024, 512, 256):
                if self._d_hid_p % c == 0 and \
                        self._vmem_bytes(bb, c, itemsize) <= budget:
                    k_chunk = c
                    break
            # Still too big (huge d_in/d_out): shrink the batch tile.
            while (self._vmem_bytes(bb, k_chunk, itemsize) > budget
                   and bb > max(sub, 128)):
                bb = max(sub, _round_up(bb // 2, sub))
        assert self._d_hid_p % k_chunk == 0
        return bb, k_chunk

    def __call__(self, x, *, force_k_chunk=None):
        B = x.shape[0]
        bb, k_chunk = self._choose_tiling(B, self.w1p.dtype, force_k_chunk)
        hi = jnp.dtype(self.w1p.dtype) == jnp.dtype(jnp.float32)
        return _mlp_forward_padded(
            x, self.w1p, self.b1p, self.w2p, self.b2p,
            d_out=self.d_out, block_b=bb, k_chunk=k_chunk, hi_precision=hi)


# ----------------------------------------------------------------------------
# Parameter init mimicking torch.nn.Linear (uniform +-1/sqrt(fan_in)).
# Weights are returned pre-transposed: [in, out]; biases are 1-D.
# ----------------------------------------------------------------------------
def init_mlp_params(key, input_size, hidden_size, output_size, dtype=jnp.float32):
    k1, k2, k3, k4 = jax.random.split(key, 4)
    bound1 = 1.0 / (input_size ** 0.5)
    bound2 = 1.0 / (hidden_size ** 0.5)
    w1 = jax.random.uniform(k1, (input_size, hidden_size), dtype, -bound1, bound1)
    b1 = jax.random.uniform(k2, (hidden_size,), dtype, -bound1, bound1)
    w2 = jax.random.uniform(k3, (hidden_size, output_size), dtype, -bound2, bound2)
    b2 = jax.random.uniform(k4, (output_size,), dtype, -bound2, bound2)
    return w1, b1, w2, b2


if __name__ == "__main__":
    key = jax.random.PRNGKey(0)
    k_x, k_p = jax.random.split(key)

    B, D_IN, D_HID, D_OUT = 16, 32, 64, 16
    x = jax.random.normal(k_x, (B, D_IN), dtype=jnp.float32)
    w1, b1, w2, b2 = init_mlp_params(k_p, D_IN, D_HID, D_OUT, dtype=jnp.float32)
    ref = jnp.maximum(x @ w1 + b1[None, :], 0.0) @ w2 + b2[None, :]

    # 1) f32, fused path (weights resident in VMEM).
    mlp = PallasMLP(w1, b1, w2, b2)
    out = jax.block_until_ready(mlp(x))
    assert out.shape == (B, D_OUT)
    assert jnp.allclose(out, ref, atol=1e-5, rtol=1e-5), "f32 mismatch vs reference"

    # 2) K-tiled (hidden-dim-chunked) path exercised explicitly: d_hid padded
    #    to 256, forced k_chunk=128 -> 2 accumulation steps along the grid.
    w1b, b1b, w2b, b2b = init_mlp_params(jax.random.PRNGKey(1), D_IN, 256, D_OUT)
    refb = jnp.maximum(x @ w1b + b1b[None, :], 0.0) @ w2b + b2b[None, :]
    mlp_k = PallasMLP(w1b, b1b, w2b, b2b)
    out_k = jax.block_until_ready(mlp_k(x, force_k_chunk=128))
    assert out_k.shape == (B, D_OUT)
    assert jnp.allclose(out_k, refb, atol=1e-5, rtol=1e-5), "K-tiled mismatch"

    # 3) bf16 compute path (MXU-native, f32 accumulation): looser tolerance by
    #    design (hidden activation is cast to bf16 before fc2).
    mlp_bf16 = PallasMLP(w1, b1, w2, b2, compute_dtype=jnp.bfloat16)
    out_bf16 = jax.block_until_ready(mlp_bf16(x))
    assert out_bf16.shape == (B, D_OUT)
    assert jnp.allclose(out_bf16.astype(jnp.float32), ref, atol=5e-2, rtol=5e-2), \
        "bf16 mismatch vs reference"

    print("KERNEL_OK")
</pallas_src>

<mosaic_0001>
module attributes {stable_mosaic.version = 11 : i64} {
  func.func @_mlp_fused_kernel(%arg0: i32, %arg1: memref<16x128xf32, #tpu.memory_space<vmem>>, %arg2: memref<128x128xf32, #tpu.memory_space<vmem>>, %arg3: memref<1x128xf32, #tpu.memory_space<vmem>>, %arg4: memref<128x128xf32, #tpu.memory_space<vmem>>, %arg5: memref<1x128xf32, #tpu.memory_space<vmem>>, %arg6: memref<16x128xf32, #tpu.memory_space<vmem>>) attributes {dimension_semantics = [#tpu.dimension_semantics<parallel>], iteration_bounds = array<i64: 1>, scalar_prefetch = 0 : i64, scratch_operands = 0 : i64, tpu.core_type = #tpu.core_type<tc>, window_params = [{transform_indices = @transform_0, window_bounds = array<i64: 16, 128>}, {pipeline_mode = #tpu.pipeline_mode<synchronous>, transform_indices = @transform_1, window_bounds = array<i64: 128, 128>}, {pipeline_mode = #tpu.pipeline_mode<synchronous>, transform_indices = @transform_2, window_bounds = array<i64: 1, 128>}, {pipeline_mode = #tpu.pipeline_mode<synchronous>, transform_indices = @transform_3, window_bounds = array<i64: 128, 128>}, {pipeline_mode = #tpu.pipeline_mode<synchronous>, transform_indices = @transform_4, window_bounds = array<i64: 1, 128>}, {transform_indices = @transform_5, window_bounds = array<i64: 16, 128>}]} {
    %c0 = arith.constant 0 : index
    %c0_0 = arith.constant 0 : index
    %0 = vector.load %arg1[%c0, %c0_0] : memref<16x128xf32, #tpu.memory_space<vmem>>, vector<16x128xf32>
    %c0_1 = arith.constant 0 : index
    %c0_2 = arith.constant 0 : index
    %1 = vector.load %arg2[%c0_1, %c0_2] : memref<128x128xf32, #tpu.memory_space<vmem>>, vector<128x128xf32>
    %cst = arith.constant dense<0.000000e+00> : vector<16x128xf32>
    %2 = tpu.matmul %0, %1, %cst {dimension_numbers = #tpu.dot_dimension_numbers<[1], [0], [0], [1], [0, 0, 1, 1], [], []>, precision = #tpu.contract_precision<fp32>} : vector<16x128xf32>, vector<128x128xf32>, vector<16x128xf32> -> vector<16x128xf32>
    %c0_3 = arith.constant 0 : index
    %c0_4 = arith.constant 0 : index
    %3 = vector.load %arg3[%c0_3, %c0_4] : memref<1x128xf32, #tpu.memory_space<vmem>>, vector<1x128xf32>
    %4 = vector.broadcast %3 : vector<1x128xf32> to vector<16x128xf32>
    %5 = arith.addf %2, %4 : vector<16x128xf32>
    %cst_5 = arith.constant 0.000000e+00 : f32
    %6 = vector.broadcast %cst_5 : f32 to vector<16x128xf32>
    %7 = arith.maximumf %5, %6 : vector<16x128xf32>
    %c0_6 = arith.constant 0 : index
    %c0_7 = arith.constant 0 : index
    %8 = vector.load %arg4[%c0_6, %c0_7] : memref<128x128xf32, #tpu.memory_space<vmem>>, vector<128x128xf32>
    %cst_8 = arith.constant dense<0.000000e+00> : vector<16x128xf32>
    %9 = tpu.matmul %7, %8, %cst_8 {dimension_numbers = #tpu.dot_dimension_numbers<[1], [0], [0], [1], [0, 0, 1, 1], [], []>, precision = #tpu.contract_precision<fp32>} : vector<16x128xf32>, vector<128x128xf32>, vector<16x128xf32> -> vector<16x128xf32>
    %c0_9 = arith.constant 0 : index
    %c0_10 = arith.constant 0 : index
    %10 = vector.load %arg5[%c0_9, %c0_10] : memref<1x128xf32, #tpu.memory_space<vmem>>, vector<1x128xf32>
    %11 = vector.broadcast %10 : vector<1x128xf32> to vector<16x128xf32>
    %12 = arith.addf %9, %11 : vector<16x128xf32>
    %c0_11 = arith.constant 0 : index
    %c0_12 = arith.constant 0 : index
    %13 = vector.load %arg6[%c0_11, %c0_12] : memref<16x128xf32, #tpu.memory_space<vmem>>, vector<16x128xf32>
    tpu.vector_store %arg6[%c0_11, %c0_12], %12 {strides = array<i32>} : memref<16x128xf32, #tpu.memory_space<vmem>>, vector<16x128xf32>,
    return
  }
  func.func @transform_0(%arg0: i32) -> (i32, i32) {
    %c0_i32 = arith.constant 0 : i32
    %c0_i32_0 = arith.constant 0 : i32
    return %arg0, %c0_i32 : i32, i32
  }
  func.func @transform_1(%arg0: i32) -> (i32, i32) {
    %c0_i32 = arith.constant 0 : i32
    %c0_i32_0 = arith.constant 0 : i32
    %c0_i32_1 = arith.constant 0 : i32
    return %c0_i32, %c0_i32_0 : i32, i32
  }
  func.func @transform_2(%arg0: i32) -> (i32, i32) {
    %c0_i32 = arith.constant 0 : i32
    %c0_i32_0 = arith.constant 0 : i32
    %c0_i32_1 = arith.constant 0 : i32
    return %c0_i32, %c0_i32_0 : i32, i32
  }
  func.func @transform_3(%arg0: i32) -> (i32, i32) {
    %c0_i32 = arith.constant 0 : i32
    %c0_i32_0 = arith.constant 0 : i32
    %c0_i32_1 = arith.constant 0 : i32
    return %c0_i32, %c0_i32_0 : i32, i32
  }
  func.func @transform_4(%arg0: i32) -> (i32, i32) {
    %c0_i32 = arith.constant 0 : i32
    %c0_i32_0 = arith.constant 0 : i32
    %c0_i32_1 = arith.constant 0 : i32
    return %c0_i32, %c0_i32_0 : i32, i32
  }
  func.func @transform_5(%arg0: i32) -> (i32, i32) {
    %c0_i32 = arith.constant 0 : i32
    %c0_i32_0 = arith.constant 0 : i32
    return %arg0, %c0_i32 : i32, i32
  }
}

</mosaic_0001>

<llo_original>
// kernel: _mlp_forward_padded.1
$region0: #{_mlp_forward_padded.1}
  #allocation0 [shape = 'u32[]', space=smem, size = 0x4, offset = 0x4, fixed_abs, tag = 'smem constant byte address 0x4 - core index']
  #allocation1 [shape = 'u32[144,128]{1,0:T(1,128)}', space=vmem, size = 0x12000, scoped, tag = 'internal scratch']
  %s0 = inlined_call_operand.vmem [shape: f32[16,128], index: 0, kind: input, shape index: {}]
  %s1 = inlined_call_operand.hbm [shape: f32[128,128], index: 1, kind: input, shape index: {}]
  %s2 = inlined_call_operand.vmem [shape: f32[1,128], index: 2, kind: input, shape index: {}]
  %s3 = inlined_call_operand.hbm [shape: f32[128,128], index: 3, kind: input, shape index: {}]
  %s4 = inlined_call_operand.vmem [shape: f32[1,128], index: 4, kind: input, shape index: {}]
  %s5 = inlined_call_operand.hbm [shape: f32[16,128], index: 5, kind: output, shape index: {}]
  %s6 = sld [smem:[#allocation0]]
  $region38: #{_mlp_forward_padded.1} parent=0
    _
  %s8 = ssub.s32 1, %s6
  %s9 = scalar_select 0, %s8, %s6
  $region1: #{_mlp_forward_padded.1} parent=0
    #allocation2 [shape = 'u8[65536]{0}', space=vmem, size = 0x10000, scoped, tag = 'input window, operand 1, single buffered']
    #allocation3 [shape = 's32[1]{0}', space=sflag, size = 0x4, scoped, tag = 'scoped memory for _mlp_forward_padded.1']
    #allocation4 [shape = 's32[1]{0}', space=sflag, size = 0x4, scoped, tag = 'scoped memory for _mlp_forward_padded.1']
    #allocation5 [shape = 'u8[65536]{0}', space=vmem, size = 0x10000, scoped, tag = 'input window, operand 3, single buffered']
    #allocation6 [shape = 's32[1]{0}', space=sflag, size = 0x4, scoped, tag = 'scoped memory for _mlp_forward_padded.1']
    #allocation7 [shape = 'u8[8192]{0}', space=vmem, size = 0x2000, scoped, tag = 'output window, operand 0, single buffered']
    %10 = vsyncpa [#allocation3], 0
    %11 = vsyncpa [#allocation6], 0
    %12 = vsyncpa [#allocation4], 0
    // Predicated region
    $region2: #{_mlp_forward_padded.1} parent=1 // pred_check
      _
    $region3: #{_mlp_forward_padded.1} parent=1 // pred_check_branch
      %14 = sbr.rel (0) target = $region5
    $region4: #{_mlp_forward_padded.1} parent=1 // pred_region
      _
    $region5: #{_mlp_forward_padded.1} parent=1 // pred_fallthru
      _
    // Predicated region
    $region6: #{_mlp_forward_padded.1} parent=1 // pred_check
      _
    $region7: #{_mlp_forward_padded.1} parent=1 // pred_check_branch
      %16 = sbr.rel (0) target = $region9
    $region8: #{_mlp_forward_padded.1} parent=1 // pred_region
      %s18 = ssub.s32 2048, 2048
      %19 = vsyncadd [#allocation3], %s18
      %s20 = sshll.u32 [#allocation2], 4
      %s21 = int_to_ptr.vmem [resolvable:$true] %s20
      %26 = dma.hbm_to_vmem [thread:$0]  %s1, 2048, %s21, [#allocation3], 128, 128, 8
    $region9: #{_mlp_forward_padded.1} parent=1 // pred_fallthru
      _
    // Predicated region
    $region10: #{_mlp_forward_padded.1} parent=1 // pred_check
      _
    $region11: #{_mlp_forward_padded.1} parent=1 // pred_check_branch
      %28 = sbr.rel (0) target = $region13
    $region12: #{_mlp_forward_padded.1} parent=1 // pred_region
      _
    $region13: #{_mlp_forward_padded.1} parent=1 // pred_fallthru
      _
    // Predicated region
    $region14: #{_mlp_forward_padded.1} parent=1 // pred_check
      _
    $region15: #{_mlp_forward_padded.1} parent=1 // pred_check_branch
      %30 = sbr.rel (0) target = $region17
    $region16: #{_mlp_forward_padded.1} parent=1 // pred_region
      %s32 = ssub.s32 2048, 2048
      %33 = vsyncadd [#allocation6], %s32
      %s34 = sshll.u32 [#allocation5], 4
      %s35 = int_to_ptr.vmem [resolvable:$true] %s34
      %40 = dma.hbm_to_vmem [thread:$0]  %s3, 2048, %s35, [#allocation6], 128, 128, 8
    $region17: #{_mlp_forward_padded.1} parent=1 // pred_fallthru
      _
    // Predicated region
    $region18: #{_mlp_forward_padded.1} parent=1 // pred_check
      _
    $region19: #{_mlp_forward_padded.1} parent=1 // pred_check_branch
      %42 = sbr.rel (0) target = $region21
    $region20: #{_mlp_forward_padded.1} parent=1 // pred_region
      _
    $region21: #{_mlp_forward_padded.1} parent=1 // pred_fallthru
      _
    // Predicated region
    $region22: #{_mlp_forward_padded.1} parent=1 // pred_check
      _
    $region23: #{_mlp_forward_padded.1} parent=1 // pred_check_branch
      %44 = sbr.rel (0) target = $region25
    $region24: #{_mlp_forward_padded.1} parent=1 // pred_region
      %45 = dma.done [#allocation3], 2048
    $region25: #{_mlp_forward_padded.1} parent=1 // pred_fallthru
      _
    // Predicated region
    $region26: #{_mlp_forward_padded.1} parent=1 // pred_check
      _
    $region27: #{_mlp_forward_padded.1} parent=1 // pred_check_branch
      %47 = sbr.rel (0) target = $region29
    $region28: #{_mlp_forward_padded.1} parent=1 // pred_region
      %48 = dma.done [#allocation6], 2048
    $region29: #{_mlp_forward_padded.1} parent=1 // pred_fallthru
      _
    %v49 = vld [vmem:[%s0] sm:$0xff]
    %v50 = vld [vmem:[%s0 + $0x8] sm:$0xff]
    %v51 = vld [vmem:[#allocation2] sm:$0xff]
    %v52 = vld [vmem:[#allocation2 + $0x8] sm:$0xff]
    %v53 = vld [vmem:[#allocation2 + $0x10] sm:$0xff]
    %v54 = vld [vmem:[#allocation2 + $0x18] sm:$0xff]
    %v55 = vld [vmem:[#allocation2 + $0x20] sm:$0xff]
    %v56 = vld [vmem:[#allocation2 + $0x28] sm:$0xff]
    %v57 = vld [vmem:[#allocation2 + $0x30] sm:$0xff]
    %v58 = vld [vmem:[#allocation2 + $0x38] sm:$0xff]
    %v59 = vld [vmem:[#allocation2 + $0x40] sm:$0xff]
    %v60 = vld [vmem:[#allocation2 + $0x48] sm:$0xff]
    %v61 = vld [vmem:[#allocation2 + $0x50] sm:$0xff]
    %v62 = vld [vmem:[#allocation2 + $0x58] sm:$0xff]
    %v63 = vld [vmem:[#allocation2 + $0x60] sm:$0xff]
    %v64 = vld [vmem:[#allocation2 + $0x68] sm:$0xff]
    %v65 = vld [vmem:[#allocation2 + $0x70] sm:$0xff]
    %v66 = vld [vmem:[#allocation2 + $0x78] sm:$0xff]
    %v67 = vld [vmem:[%s2] sm:$0x1]
    %v69 = vlaneseq
    %v70 = vshrl.u32 %v69, 7
    %v71 = vsub.s32 0, %v70
    %v72 = vrot.slane %v67, %v71
    %74 = vmatprep.subr.mxu0 0.0
    %v75 = vand.u32 %v51, 4294901760
    %76 = vmatpush1.msra.mxu0 %v75
    %77 = vmatprep.subr.mxu0 0.0
    %v78 = vand.u32 %v52, 4294901760
    %79 = vmatpush1.msra.mxu0 %v78
    %80 = vmatprep.subr.mxu0 0.0
    %v81 = vand.u32 %v53, 4294901760
    %82 = vmatpush1.msra.mxu0 %v81
    %83 = vmatprep.subr.mxu0 0.0
    %v84 = vand.u32 %v54, 4294901760
    %85 = vmatpush1.msra.mxu0 %v84
    %86 = vmatprep.subr.mxu0 0.0
    %v87 = vand.u32 %v55, 4294901760
    %88 = vmatpush1.msra.mxu0 %v87
    %89 = vmatprep.subr.mxu0 0.0
    %v90 = vand.u32 %v56, 4294901760
    %91 = vmatpush1.msra.mxu0 %v90
    %92 = vmatprep.subr.mxu0 0.0
    %v93 = vand.u32 %v57, 4294901760
    %94 = vmatpush1.msra.mxu0 %v93
    %95 = vmatprep.subr.mxu0 0.0
    %v96 = vand.u32 %v58, 4294901760
    %97 = vmatpush1.msra.mxu0 %v96
    %98 = vmatprep.subr.mxu0 0.0
    %v99 = vand.u32 %v59, 4294901760
    %100 = vmatpush1.msra.mxu0 %v99
    %101 = vmatprep.subr.mxu0 0.0
    %v102 = vand.u32 %v60, 4294901760
    %103 = vmatpush1.msra.mxu0 %v102
    %104 = vmatprep.subr.mxu0 0.0
    %v105 = vand.u32 %v61, 4294901760
    %106 = vmatpush1.msra.mxu0 %v105
    %107 = vmatprep.subr.mxu0 0.0
    %v108 = vand.u32 %v62, 4294901760
    %109 = vmatpush1.msra.mxu0 %v108
    %110 = vmatprep.subr.mxu0 0.0
    %v111 = vand.u32 %v63, 4294901760
    %112 = vmatpush1.msra.mxu0 %v111
    %113 = vmatprep.subr.mxu0 0.0
    %v114 = vand.u32 %v64, 4294901760
    %115 = vmatpush1.msra.mxu0 %v114
    %116 = vmatprep.subr.mxu0 0.0
    %v117 = vand.u32 %v65, 4294901760
    %118 = vmatpush1.msra.mxu0 %v117
    %119 = vmatprep.subr.mxu0 0.0
    %v120 = vand.u32 %v66, 4294901760
    %121 = vmatpush1.msra.mxu0 %v120
    %122 = vmatprep.subr.mxu0 0.0
    %123 = vmatpush1.msra.mxu0 0.0
    %124 = vmatprep.subr.mxu0 0.0
    %125 = vmatpush1.msra.mxu0 0.0
    %126 = vmatprep.subr.mxu0 0.0
    %127 = vmatpush1.msra.mxu0 0.0
    %128 = vmatprep.subr.mxu0 0.0
    %129 = vmatpush1.msra.mxu0 0.0
    %130 = vmatprep.subr.mxu0 0.0
    %131 = vmatpush1.msra.mxu0 0.0
    %132 = vmatprep.subr.mxu0 0.0
    %133 = vmatpush1.msra.mxu0 0.0
    %134 = vmatprep.subr.mxu0 0.0
    %135 = vmatpush1.msra.mxu0 0.0
    %136 = vmatprep.subr.mxu0 0.0
    %137 = vmatpush1.msra.mxu0 0.0
    %138 = vmatprep.subr.mxu0 0.0
    %139 = vmatpush1.msra.mxu0 0.0
    %140 = vmatprep.subr.mxu0 0.0
    %141 = vmatpush1.msra.mxu0 0.0
    %142 = vmatprep.subr.mxu0 0.0
    %143 = vmatpush1.msra.mxu0 0.0
    %144 = vmatprep.subr.mxu0 0.0
    %145 = vmatpush1.msra.mxu0 0.0
    %146 = vmatprep.subr.mxu0 0.0
    %147 = vmatpush1.msra.mxu0 0.0
    %148 = vmatprep.subr.mxu0 0.0
    %149 = vmatpush1.msra.mxu0 0.0
    %150 = vmatprep.subr.mxu0 0.0
    %151 = vmatpush1.msra.mxu0 0.0
    %152 = vmatprep.subr.mxu0 0.0
    %153 = vmatpush1.msra.mxu0 0.0
    %154 = vmatprep.mubr.f32.mxu0 0.0
    %v155 = vand.u32 %v49, 4294901760
    %v156 = vsub.f32 %v49, %v155
    %v157 = vand.u32 %v156, 4294901760
    %v158 = vsub.f32 %v156, %v157
    %v159 = vand.u32 %v158, 4294901760
    %160 = vmatmul.mubr.f32.gmra.mrb[0].mxu0 %v159
    %v161 = vpop.f32.mrb[0].mxu0
    %v162 = vadd.f32 %v72, %v161
    %v163 = vpop.f32.mrb[0].mxu0
    %164 = vmatprep.mubr.f32.mxu0 0.0
    %v165 = vand.u32 %v50, 4294901760
    %v166 = vsub.f32 %v50, %v165
    %v167 = vand.u32 %v166, 4294901760
    %v168 = vsub.f32 %v166, %v167
    %v169 = vand.u32 %v168, 4294901760
    %170 = vmatmul.mubr.f32.gmra.mrb[0].mxu0 %v169
    %v171 = vpop.f32.mrb[0].mxu0
    %v172 = vadd.f32 %v72, %v171
    %v173 = vpop.f32.mrb[0].mxu0
    %174 = vdwg.mxu0
    %175 = vmatprep.subr.mxu0 0.0
    %v176 = vand.u32 %v51, 4294901760
    %v177 = vsub.f32 %v51, %v176
    %v178 = vand.u32 %v177, 4294901760
    %v179 = vsub.f32 %v177, %v178
    %v180 = vand.u32 %v179, 4294901760
    %181 = vmatpush1.msra.mxu0 %v180
    %182 = vmatprep.subr.mxu0 0.0
    %v183 = vand.u32 %v52, 4294901760
    %v184 = vsub.f32 %v52, %v183
    %v185 = vand.u32 %v184, 4294901760
    %v186 = vsub.f32 %v184, %v185
    %v187 = vand.u32 %v186, 4294901760
    %188 = vmatpush1.msra.mxu0 %v187
    %189 = vmatprep.subr.mxu0 0.0
    %v190 = vand.u32 %v53, 4294901760
    %v191 = vsub.f32 %v53, %v190
    %v192 = vand.u32 %v191, 4294901760
    %v193 = vsub.f32 %v191, %v192
    %v194 = vand.u32 %v193, 4294901760
    %195 = vmatpush1.msra.mxu0 %v194
    %196 = vmatprep.subr.mxu0 0.0
    %v197 = vand.u32 %v54, 4294901760
    %v198 = vsub.f32 %v54, %v197
    %v199 = vand.u32 %v198, 4294901760
    %v200 = vsub.f32 %v198, %v199
    %v201 = vand.u32 %v200, 4294901760
    %202 = vmatpush1.msra.mxu0 %v201
    %203 = vmatprep.subr.mxu0 0.0
    %v204 = vand.u32 %v55, 4294901760
    %v205 = vsub.f32 %v55, %v204
    %v206 = vand.u32 %v205, 4294901760
    %v207 = vsub.f32 %v205, %v206
    %v208 = vand.u32 %v207, 4294901760
    %209 = vmatpush1.msra.mxu0 %v208
    %210 = vmatprep.subr.mxu0 0.0
    %v211 = vand.u32 %v56, 4294901760
    %v212 = vsub.f32 %v56, %v211
    %v213 = vand.u32 %v212, 4294901760
    %v214 = vsub.f32 %v212, %v213
    %v215 = vand.u32 %v214, 4294901760
    %216 = vmatpush1.msra.mxu0 %v215
    %217 = vmatprep.subr.mxu0 0.0
    %v218 = vand.u32 %v57, 4294901760
    %v219 = vsub.f32 %v57, %v218
    %v220 = vand.u32 %v219, 4294901760
    %v221 = vsub.f32 %v219, %v220
    %v222 = vand.u32 %v221, 4294901760
    %223 = vmatpush1.msra.mxu0 %v222
    %224 = vmatprep.subr.mxu0 0.0
    %v225 = vand.u32 %v58, 4294901760
    %v226 = vsub.f32 %v58, %v225
    %v227 = vand.u32 %v226, 4294901760
    %v228 = vsub.f32 %v226, %v227
    %v229 = vand.u32 %v228, 4294901760
    %230 = vmatpush1.msra.mxu0 %v229
    %231 = vmatprep.subr.mxu0 0.0
    %v232 = vand.u32 %v59, 4294901760
    %v233 = vsub.f32 %v59, %v232
    %v234 = vand.u32 %v233, 4294901760
    %v235 = vsub.f32 %v233, %v234
    %v236 = vand.u32 %v235, 4294901760
    %237 = vmatpush1.msra.mxu0 %v236
    %238 = vmatprep.subr.mxu0 0.0
    %v239 = vand.u32 %v60, 4294901760
    %v240 = vsub.f32 %v60, %v239
    %v241 = vand.u32 %v240, 4294901760
    %v242 = vsub.f32 %v240, %v241
    %v243 = vand.u32 %v242, 4294901760
    %244 = vmatpush1.msra.mxu0 %v243
    %245 = vmatprep.subr.mxu0 0.0
    %v246 = vand.u32 %v61, 4294901760
    %v247 = vsub.f32 %v61, %v246
    %v248 = vand.u32 %v247, 4294901760
    %v249 = vsub.f32 %v247, %v248
    %v250 = vand.u32 %v249, 4294901760
    %251 = vmatpush1.msra.mxu0 %v250
    %252 = vmatprep.subr.mxu0 0.0
    %v253 = vand.u32 %v62, 4294901760
    %v254 = vsub.f32 %v62, %v253
    %v255 = vand.u32 %v254, 4294901760
    %v256 = vsub.f32 %v254, %v255
    %v257 = vand.u32 %v256, 4294901760
    %258 = vmatpush1.msra.mxu0 %v257
    %259 = vmatprep.subr.mxu0 0.0
    %v260 = vand.u32 %v63, 4294901760
    %v261 = vsub.f32 %v63, %v260
    %v262 = vand.u32 %v261, 4294901760
    %v263 = vsub.f32 %v261, %v262
    %v264 = vand.u32 %v263, 4294901760
    %265 = vmatpush1.msra.mxu0 %v264
    %266 = vmatprep.subr.mxu0 0.0
    %v267 = vand.u32 %v64, 4294901760
    %v268 = vsub.f32 %v64, %v267
    %v269 = vand.u32 %v268, 4294901760
    %v270 = vsub.f32 %v268, %v269
    %v271 = vand.u32 %v270, 4294901760
    %272 = vmatpush1.msra.mxu0 %v271
    %273 = vmatprep.subr.mxu0 0.0
    %v274 = vand.u32 %v65, 4294901760
    %v275 = vsub.f32 %v65, %v274
    %v276 = vand.u32 %v275, 4294901760
    %v277 = vsub.f32 %v275, %v276
    %v278 = vand.u32 %v277, 4294901760
    %279 = vmatpush1.msra.mxu0 %v278
    %280 = vmatprep.subr.mxu0 0.0
    %v281 = vand.u32 %v66, 4294901760
    %v282 = vsub.f32 %v66, %v281
    %v283 = vand.u32 %v282, 4294901760
    %v284 = vsub.f32 %v282, %v283
    %v285 = vand.u32 %v284, 4294901760
    %286 = vmatpush1.msra.mxu0 %v285
    %287 = vmatprep.subr.mxu0 0.0
    %288 = vmatpush1.msra.mxu0 0.0
    %289 = vmatprep.subr.mxu0 0.0
    %290 = vmatpush1.msra.mxu0 0.0
    %291 = vmatprep.subr.mxu0 0.0
    %292 = vmatpush1.msra.mxu0 0.0
    %293 = vmatprep.subr.mxu0 0.0
    %294 = vmatpush1.msra.mxu0 0.0
    %295 = vmatprep.subr.mxu0 0.0
    %296 = vmatpush1.msra.mxu0 0.0
    %297 = vmatprep.subr.mxu0 0.0
    %298 = vmatpush1.msra.mxu0 0.0
    %299 = vmatprep.subr.mxu0 0.0
    %300 = vmatpush1.msra.mxu0 0.0
    %301 = vmatprep.subr.mxu0 0.0
    %302 = vmatpush1.msra.mxu0 0.0
    %303 = vmatprep.subr.mxu0 0.0
    %304 = vmatpush1.msra.mxu0 0.0
    %305 = vmatprep.subr.mxu0 0.0
    %306 = vmatpush1.msra.mxu0 0.0
    %307 = vmatprep.subr.mxu0 0.0
    %308 = vmatpush1.msra.mxu0 0.0
    %309 = vmatprep.subr.mxu0 0.0
    %310 = vmatpush1.msra.mxu0 0.0
    %311 = vmatprep.subr.mxu0 0.0
    %312 = vmatpush1.msra.mxu0 0.0
    %313 = vmatprep.subr.mxu0 0.0
    %314 = vmatpush1.msra.mxu0 0.0
    %315 = vmatprep.subr.mxu0 0.0
    %316 = vmatpush1.msra.mxu0 0.0
    %317 = vmatprep.subr.mxu0 0.0
    %318 = vmatpush1.msra.mxu0 0.0
    %319 = vmatprep.mubr.f32.mxu0 0.0
    %v320 = vand.u32 %v49, 4294901760
    %321 = vmatmul.mubr.f32.gmra.mrb[0].mxu0 %v320
    %v322 = vpop.f32.mrb[0].mxu0
    %v323 = vadd.f32 %v162, %v322
    %v324 = vpop.f32.mrb[0].mxu0
    %325 = vmatprep.mubr.f32.mxu0 0.0
    %v326 = vand.u32 %v50, 4294901760
    %327 = vmatmul.mubr.f32.gmra.mrb[0].mxu0 %v326
    %v328 = vpop.f32.mrb[0].mxu0
    %v329 = vadd.f32 %v172, %v328
    %v330 = vpop.f32.mrb[0].mxu0
    %331 = vdwg.mxu0
    %332 = vmatprep.subr.mxu0 0.0
    %v333 = vand.u32 %v51, 4294901760
    %v334 = vsub.f32 %v51, %v333
    %335 = vmatpush1.msra.mxu0 %v334
    %336 = vmatprep.subr.mxu0 0.0
    %v337 = vand.u32 %v52, 4294901760
    %v338 = vsub.f32 %v52, %v337
    %339 = vmatpush1.msra.mxu0 %v338
    %340 = vmatprep.subr.mxu0 0.0
    %v341 = vand.u32 %v53, 4294901760
    %v342 = vsub.f32 %v53, %v341
    %343 = vmatpush1.msra.mxu0 %v342
    %344 = vmatprep.subr.mxu0 0.0
    %v345 = vand.u32 %v54, 4294901760
    %v346 = vsub.f32 %v54, %v345
    %347 = vmatpush1.msra.mxu0 %v346
    %348 = vmatprep.subr.mxu0 0.0
    %v349 = vand.u32 %v55, 4294901760
    %v350 = vsub.f32 %v55, %v349
    %351 = vmatpush1.msra.mxu0 %v350
    %352 = vmatprep.subr.mxu0 0.0
    %v353 = vand.u32 %v56, 4294901760
    %v354 = vsub.f32 %v56, %v353
    %355 = vmatpush1.msra.mxu0 %v354
    %356 = vmatprep.subr.mxu0 0.0
    %v357 = vand.u32 %v57, 4294901760
    %v358 = vsub.f32 %v57, %v357
    %359 = vmatpush1.msra.mxu0 %v358
    %360 = vmatprep.subr.mxu0 0.0
    %v361 = vand.u32 %v58, 4294901760
    %v362 = vsub.f32 %v58, %v361
    %363 = vmatpush1.msra.mxu0 %v362
    %364 = vmatprep.subr.mxu0 0.0
    %v365 = vand.u32 %v59, 4294901760
    %v366 = vsub.f32 %v59, %v365
    %367 = vmatpush1.msra.mxu0 %v366
    %368 = vmatprep.subr.mxu0 0.0
    %v369 = vand.u32 %v60, 4294901760
    %v370 = vsub.f32 %v60, %v369
    %371 = vmatpush1.msra.mxu0 %v370
    %372 = vmatprep.subr.mxu0 0.0
    %v373 = vand.u32 %v61, 4294901760
    %v374 = vsub.f32 %v61, %v373
    %375 = vmatpush1.msra.mxu0 %v374
    %376 = vmatprep.subr.mxu0 0.0
    %v377 = vand.u32 %v62, 4294901760
    %v378 = vsub.f32 %v62, %v377
    %379 = vmatpush1.msra.mxu0 %v378
    %380 = vmatprep.subr.mxu0 0.0
    %v381 = vand.u32 %v63, 4294901760
    %v382 = vsub.f32 %v63, %v381
    %383 = vmatpush1.msra.mxu0 %v382
    %384 = vmatprep.subr.mxu0 0.0
    %v385 = vand.u32 %v64, 4294901760
    %v386 = vsub.f32 %v64, %v385
    %387 = vmatpush1.msra.mxu0 %v386
    %388 = vmatprep.subr.mxu0 0.0
    %v389 = vand.u32 %v65, 4294901760
    %v390 = vsub.f32 %v65, %v389
    %391 = vmatpush1.msra.mxu0 %v390
    %392 = vmatprep.subr.mxu0 0.0
    %v393 = vand.u32 %v66, 4294901760
    %v394 = vsub.f32 %v66, %v393
    %395 = vmatpush1.msra.mxu0 %v394
    %396 = vmatprep.subr.mxu0 0.0
    %397 = vmatpush1.msra.mxu0 0.0
    %398 = vmatprep.subr.mxu0 0.0
    %399 = vmatpush1.msra.mxu0 0.0
    %400 = vmatprep.subr.mxu0 0.0
    %401 = vmatpush1.msra.mxu0 0.0
    %402 = vmatprep.subr.mxu0 0.0
    %403 = vmatpush1.msra.mxu0 0.0
    %404 = vmatprep.subr.mxu0 0.0
    %405 = vmatpush1.msra.mxu0 0.0
    %406 = vmatprep.subr.mxu0 0.0
    %407 = vmatpush1.msra.mxu0 0.0
    %408 = vmatprep.subr.mxu0 0.0
    %409 = vmatpush1.msra.mxu0 0.0
    %410 = vmatprep.subr.mxu0 0.0
    %411 = vmatpush1.msra.mxu0 0.0
    %412 = vmatprep.subr.mxu0 0.0
    %413 = vmatpush1.msra.mxu0 0.0
    %414 = vmatprep.subr.mxu0 0.0
    %415 = vmatpush1.msra.mxu0 0.0
    %416 = vmatprep.subr.mxu0 0.0
    %417 = vmatpush1.msra.mxu0 0.0
    %418 = vmatprep.subr.mxu0 0.0
    %419 = vmatpush1.msra.mxu0 0.0
    %420 = vmatprep.subr.mxu0 0.0
    %421 = vmatpush1.msra.mxu0 0.0
    %422 = vmatprep.subr.mxu0 0.0
    %423 = vmatpush1.msra.mxu0 0.0
    %424 = vmatprep.subr.mxu0 0.0
    %425 = vmatpush1.msra.mxu0 0.0
    %426 = vmatprep.subr.mxu0 0.0
    %427 = vmatpush1.msra.mxu0 0.0
    %428 = vmatprep.mubr.f32.mxu0 0.0
    %v429 = vand.u32 %v49, 4294901760
    %v430 = vsub.f32 %v49, %v429
    %431 = vmatmul.mubr.f32.gmra.mrb[0].mxu0 %v430
    %v432 = vpop.f32.mrb[0].mxu0
    %v433 = vadd.f32 %v323, %v432
    %v434 = vpop.f32.mrb[0].mxu0
    %435 = vmatprep.mubr.f32.mxu0 0.0
    %v436 = vand.u32 %v50, 4294901760
    %v437 = vsub.f32 %v50, %v436
    %438 = vmatmul.mubr.f32.gmra.mrb[0].mxu0 %v437
    %v439 = vpop.f32.mrb[0].mxu0
    %v440 = vadd.f32 %v329, %v439
    %v441 = vpop.f32.mrb[0].mxu0
    %442 = vdwg.mxu0
    %443 = vmatprep.subr.mxu0 0.0
    %v444 = vand.u32 %v51, 4294901760
    %445 = vmatpush1.msra.mxu0 %v444
    %446 = vmatprep.subr.mxu0 0.0
    %v447 = vand.u32 %v52, 4294901760
    %448 = vmatpush1.msra.mxu0 %v447
    %449 = vmatprep.subr.mxu0 0.0
    %v450 = vand.u32 %v53, 4294901760
    %451 = vmatpush1.msra.mxu0 %v450
    %452 = vmatprep.subr.mxu0 0.0
    %v453 = vand.u32 %v54, 4294901760
    %454 = vmatpush1.msra.mxu0 %v453
    %455 = vmatprep.subr.mxu0 0.0
    %v456 = vand.u32 %v55, 4294901760
    %457 = vmatpush1.msra.mxu0 %v456
    %458 = vmatprep.subr.mxu0 0.0
    %v459 = vand.u32 %v56, 4294901760
    %460 = vmatpush1.msra.mxu0 %v459
    %461 = vmatprep.subr.mxu0 0.0
    %v462 = vand.u32 %v57, 4294901760
    %463 = vmatpush1.msra.mxu0 %v462
    %464 = vmatprep.subr.mxu0 0.0
    %v465 = vand.u32 %v58, 4294901760
    %466 = vmatpush1.msra.mxu0 %v465
    %467 = vmatprep.subr.mxu0 0.0
    %v468 = vand.u32 %v59, 4294901760
    %469 = vmatpush1.msra.mxu0 %v468
    %470 = vmatprep.subr.mxu0 0.0
    %v471 = vand.u32 %v60, 4294901760
    %472 = vmatpush1.msra.mxu0 %v471
    %473 = vmatprep.subr.mxu0 0.0
    %v474 = vand.u32 %v61, 4294901760
    %475 = vmatpush1.msra.mxu0 %v474
    %476 = vmatprep.subr.mxu0 0.0
    %v477 = vand.u32 %v62, 4294901760
    %478 = vmatpush1.msra.mxu0 %v477
    %479 = vmatprep.subr.mxu0 0.0
    %v480 = vand.u32 %v63, 4294901760
    %481 = vmatpush1.msra.mxu0 %v480
    %482 = vmatprep.subr.mxu0 0.0
    %v483 = vand.u32 %v64, 4294901760
    %484 = vmatpush1.msra.mxu0 %v483
    %485 = vmatprep.subr.mxu0 0.0
    %v486 = vand.u32 %v65, 4294901760
    %487 = vmatpush1.msra.mxu0 %v486
    %488 = vmatprep.subr.mxu0 0.0
    %v489 = vand.u32 %v66, 4294901760
    %490 = vmatpush1.msra.mxu0 %v489
    %491 = vmatprep.subr.mxu0 0.0
    %492 = vmatpush1.msra.mxu0 0.0
    %493 = vmatprep.subr.mxu0 0.0
    %494 = vmatpush1.msra.mxu0 0.0
    %495 = vmatprep.subr.mxu0 0.0
    %496 = vmatpush1.msra.mxu0 0.0
    %497 = vmatprep.subr.mxu0 0.0
    %498 = vmatpush1.msra.mxu0 0.0
    %499 = vmatprep.subr.mxu0 0.0
    %500 = vmatpush1.msra.mxu0 0.0
    %501 = vmatprep.subr.mxu0 0.0
    %502 = vmatpush1.msra.mxu0 0.0
    %503 = vmatprep.subr.mxu0 0.0
    %504 = vmatpush1.msra.mxu0 0.0
    %505 = vmatprep.subr.mxu0 0.0
    %506 = vmatpush1.msra.mxu0 0.0
    %507 = vmatprep.subr.mxu0 0.0
    %508 = vmatpush1.msra.mxu0 0.0
    %509 = vmatprep.subr.mxu0 0.0
    %510 = vmatpush1.msra.mxu0 0.0
    %511 = vmatprep.subr.mxu0 0.0
    %512 = vmatpush1.msra.mxu0 0.0
    %513 = vmatprep.subr.mxu0 0.0
    %514 = vmatpush1.msra.mxu0 0.0
    %515 = vmatprep.subr.mxu0 0.0
    %516 = vmatpush1.msra.mxu0 0.0
    %517 = vmatprep.subr.mxu0 0.0
    %518 = vmatpush1.msra.mxu0 0.0
    %519 = vmatprep.subr.mxu0 0.0
    %520 = vmatpush1.msra.mxu0 0.0
    %521 = vmatprep.subr.mxu0 0.0
    %522 = vmatpush1.msra.mxu0 0.0
    %523 = vmatprep.mubr.f32.mxu0 0.0
    %v524 = vand.u32 %v49, 4294901760
    %v525 = vsub.f32 %v49, %v524
    %v526 = vand.u32 %v525, 4294901760
    %527 = vmatmul.mubr.f32.gmra.mrb[0].mxu0 %v526
    %v528 = vpop.f32.mrb[0].mxu0
    %v529 = vadd.f32 %v433, %v528
    %v530 = vpop.f32.mrb[0].mxu0
    %531 = vmatprep.mubr.f32.mxu0 0.0
    %v532 = vand.u32 %v50, 4294901760
    %v533 = vsub.f32 %v50, %v532
    %v534 = vand.u32 %v533, 4294901760
    %535 = vmatmul.mubr.f32.gmra.mrb[0].mxu0 %v534
    %v536 = vpop.f32.mrb[0].mxu0
    %v537 = vadd.f32 %v440, %v536
    %v538 = vpop.f32.mrb[0].mxu0
    %539 = vdwg.mxu0
    %540 = vmatprep.subr.mxu0 0.0
    %v541 = vand.u32 %v51, 4294901760
    %v542 = vsub.f32 %v51, %v541
    %v543 = vand.u32 %v542, 4294901760
    %544 = vmatpush1.msra.mxu0 %v543
    %545 = vmatprep.subr.mxu0 0.0
    %v546 = vand.u32 %v52, 4294901760
    %v547 = vsub.f32 %v52, %v546
    %v548 = vand.u32 %v547, 4294901760
    %549 = vmatpush1.msra.mxu0 %v548
    %550 = vmatprep.subr.mxu0 0.0
    %v551 = vand.u32 %v53, 4294901760
    %v552 = vsub.f32 %v53, %v551
    %v553 = vand.u32 %v552, 4294901760
    %554 = vmatpush1.msra.mxu0 %v553
    %555 = vmatprep.subr.mxu0 0.0
    %v556 = vand.u32 %v54, 4294901760
    %v557 = vsub.f32 %v54, %v556
    %v558 = vand.u32 %v557, 4294901760
    %559 = vmatpush1.msra.mxu0 %v558
    %560 = vmatprep.subr.mxu0 0.0
    %v561 = vand.u32 %v55, 4294901760
    %v562 = vsub.f32 %v55, %v561
    %v563 = vand.u32 %v562, 4294901760
    %564 = vmatpush1.msra.mxu0 %v563
    %565 = vmatprep.subr.mxu0 0.0
    %v566 = vand.u32 %v56, 4294901760
    %v567 = vsub.f32 %v56, %v566
    %v568 = vand.u32 %v567, 4294901760
    %569 = vmatpush1.msra.mxu0 %v568
    %570 = vmatprep.subr.mxu0 0.0
    %v571 = vand.u32 %v57, 4294901760
    %v572 = vsub.f32 %v57, %v571
    %v573 = vand.u32 %v572, 4294901760
    %574 = vmatpush1.msra.mxu0 %v573
    %575 = vmatprep.subr.mxu0 0.0
    %v576 = vand.u32 %v58, 4294901760
    %v577 = vsub.f32 %v58, %v576
    %v578 = vand.u32 %v577, 4294901760
    %579 = vmatpush1.msra.mxu0 %v578
    %580 = vmatprep.subr.mxu0 0.0
    %v581 = vand.u32 %v59, 4294901760
    %v582 = vsub.f32 %v59, %v581
    %v583 = vand.u32 %v582, 4294901760
    %584 = vmatpush1.msra.mxu0 %v583
    %585 = vmatprep.subr.mxu0 0.0
    %v586 = vand.u32 %v60, 4294901760
    %v587 = vsub.f32 %v60, %v586
    %v588 = vand.u32 %v587, 4294901760
    %589 = vmatpush1.msra.mxu0 %v588
    %590 = vmatprep.subr.mxu0 0.0
    %v591 = vand.u32 %v61, 4294901760
    %v592 = vsub.f32 %v61, %v591
    %v593 = vand.u32 %v592, 4294901760
    %594 = vmatpush1.msra.mxu0 %v593
    %595 = vmatprep.subr.mxu0 0.0
    %v596 = vand.u32 %v62, 4294901760
    %v597 = vsub.f32 %v62, %v596
    %v598 = vand.u32 %v597, 4294901760
    %599 = vmatpush1.msra.mxu0 %v598
    %600 = vmatprep.subr.mxu0 0.0
    %v601 = vand.u32 %v63, 4294901760
    %v602 = vsub.f32 %v63, %v601
    %v603 = vand.u32 %v602, 4294901760
    %604 = vmatpush1.msra.mxu0 %v603
    %605 = vmatprep.subr.mxu0 0.0
    %v606 = vand.u32 %v64, 4294901760
    %v607 = vsub.f32 %v64, %v606
    %v608 = vand.u32 %v607, 4294901760
    %609 = vmatpush1.msra.mxu0 %v608
    %610 = vmatprep.subr.mxu0 0.0
    %v611 = vand.u32 %v65, 4294901760
    %v612 = vsub.f32 %v65, %v611
    %v613 = vand.u32 %v612, 4294901760
    %614 = vmatpush1.msra.mxu0 %v613
    %615 = vmatprep.subr.mxu0 0.0
    %v616 = vand.u32 %v66, 4294901760
    %v617 = vsub.f32 %v66, %v616
    %v618 = vand.u32 %v617, 4294901760
    %619 = vmatpush1.msra.mxu0 %v618
    %620 = vmatprep.subr.mxu0 0.0
    %621 = vmatpush1.msra.mxu0 0.0
    %622 = vmatprep.subr.mxu0 0.0
    %623 = vmatpush1.msra.mxu0 0.0
    %624 = vmatprep.subr.mxu0 0.0
    %625 = vmatpush1.msra.mxu0 0.0
    %626 = vmatprep.subr.mxu0 0.0
    %627 = vmatpush1.msra.mxu0 0.0
    %628 = vmatprep.subr.mxu0 0.0
    %629 = vmatpush1.msra.mxu0 0.0
    %630 = vmatprep.subr.mxu0 0.0
    %631 = vmatpush1.msra.mxu0 0.0
    %632 = vmatprep.subr.mxu0 0.0
    %633 = vmatpush1.msra.mxu0 0.0
    %634 = vmatprep.subr.mxu0 0.0
    %635 = vmatpush1.msra.mxu0 0.0
    %636 = vmatprep.subr.mxu0 0.0
    %637 = vmatpush1.msra.mxu0 0.0
    %638 = vmatprep.subr.mxu0 0.0
    %639 = vmatpush1.msra.mxu0 0.0
    %640 = vmatprep.subr.mxu0 0.0
    %641 = vmatpush1.msra.mxu0 0.0
    %642 = vmatprep.subr.mxu0 0.0
    %643 = vmatpush1.msra.mxu0 0.0
    %644 = vmatprep.subr.mxu0 0.0
    %645 = vmatpush1.msra.mxu0 0.0
    %646 = vmatprep.subr.mxu0 0.0
    %647 = vmatpush1.msra.mxu0 0.0
    %648 = vmatprep.subr.mxu0 0.0
    %649 = vmatpush1.msra.mxu0 0.0
    %650 = vmatprep.subr.mxu0 0.0
    %651 = vmatpush1.msra.mxu0 0.0
    %652 = vmatprep.mubr.f32.mxu0 0.0
    %v653 = vand.u32 %v49, 4294901760
    %654 = vmatmul.mubr.f32.gmra.mrb[0].mxu0 %v653
    %v655 = vpop.f32.mrb[0].mxu0
    %v656 = vadd.f32 %v529, %v655
    %v657 = vpop.f32.mrb[0].mxu0
    %658 = vmatprep.mubr.f32.mxu0 0.0
    %v659 = vand.u32 %v50, 4294901760
    %660 = vmatmul.mubr.f32.gmra.mrb[0].mxu0 %v659
    %v661 = vpop.f32.mrb[0].mxu0
    %v662 = vadd.f32 %v537, %v661
    %v663 = vpop.f32.mrb[0].mxu0
    %664 = vdwg.mxu0
    %665 = vmatprep.subr.mxu0 0.0
    %v666 = vand.u32 %v51, 4294901760
    %667 = vmatpush1.msra.mxu0 %v666
    %668 = vmatprep.subr.mxu0 0.0
    %v669 = vand.u32 %v52, 4294901760
    %670 = vmatpush1.msra.mxu0 %v669
    %671 = vmatprep.subr.mxu0 0.0
    %v672 = vand.u32 %v53, 4294901760
    %673 = vmatpush1.msra.mxu0 %v672
    %674 = vmatprep.subr.mxu0 0.0
    %v675 = vand.u32 %v54, 4294901760
    %676 = vmatpush1.msra.mxu0 %v675
    %677 = vmatprep.subr.mxu0 0.0
    %v678 = vand.u32 %v55, 4294901760
    %679 = vmatpush1.msra.mxu0 %v678
    %680 = vmatprep.subr.mxu0 0.0
    %v681 = vand.u32 %v56, 4294901760
    %682 = vmatpush1.msra.mxu0 %v681
    %683 = vmatprep.subr.mxu0 0.0
    %v684 = vand.u32 %v57, 4294901760
    %685 = vmatpush1.msra.mxu0 %v684
    %686 = vmatprep.subr.mxu0 0.0
    %v687 = vand.u32 %v58, 4294901760
    %688 = vmatpush1.msra.mxu0 %v687
    %689 = vmatprep.subr.mxu0 0.0
    %v690 = vand.u32 %v59, 4294901760
    %691 = vmatpush1.msra.mxu0 %v690
    %692 = vmatprep.subr.mxu0 0.0
    %v693 = vand.u32 %v60, 4294901760
    %694 = vmatpush1.msra.mxu0 %v693
    %695 = vmatprep.subr.mxu0 0.0
    %v696 = vand.u32 %v61, 4294901760
    %697 = vmatpush1.msra.mxu0 %v696
    %698 = vmatprep.subr.mxu0 0.0
    %v699 = vand.u32 %v62, 4294901760
    %700 = vmatpush1.msra.mxu0 %v699
    %701 = vmatprep.subr.mxu0 0.0
    %v702 = vand.u32 %v63, 4294901760
    %703 = vmatpush1.msra.mxu0 %v702
    %704 = vmatprep.subr.mxu0 0.0
    %v705 = vand.u32 %v64, 4294901760
    %706 = vmatpush1.msra.mxu0 %v705
    %707 = vmatprep.subr.mxu0 0.0
    %v708 = vand.u32 %v65, 4294901760
    %709 = vmatpush1.msra.mxu0 %v708
    %710 = vmatprep.subr.mxu0 0.0
    %v711 = vand.u32 %v66, 4294901760
    %712 = vmatpush1.msra.mxu0 %v711
    %713 = vmatprep.subr.mxu0 0.0
    %714 = vmatpush1.msra.mxu0 0.0
    %715 = vmatprep.subr.mxu0 0.0
    %716 = vmatpush1.msra.mxu0 0.0
    %717 = vmatprep.subr.mxu0 0.0
    %718 = vmatpush1.msra.mxu0 0.0
    %719 = vmatprep.subr.mxu0 0.0
    %720 = vmatpush1.msra.mxu0 0.0
    %721 = vmatprep.subr.mxu0 0.0
    %722 = vmatpush1.msra.mxu0 0.0
    %723 = vmatprep.subr.mxu0 0.0
    %724 = vmatpush1.msra.mxu0 0.0
    %725 = vmatprep.subr.mxu0 0.0
    %726 = vmatpush1.msra.mxu0 0.0
    %727 = vmatprep.subr.mxu0 0.0
    %728 = vmatpush1.msra.mxu0 0.0
    %729 = vmatprep.subr.mxu0 0.0
    %730 = vmatpush1.msra.mxu0 0.0
    %731 = vmatprep.subr.mxu0 0.0
    %732 = vmatpush1.msra.mxu0 0.0
    %733 = vmatprep.subr.mxu0 0.0
    %734 = vmatpush1.msra.mxu0 0.0
    %735 = vmatprep.subr.mxu0 0.0
    %736 = vmatpush1.msra.mxu0 0.0
    %737 = vmatprep.subr.mxu0 0.0
    %738 = vmatpush1.msra.mxu0 0.0
    %739 = vmatprep.subr.mxu0 0.0
    %740 = vmatpush1.msra.mxu0 0.0
    %741 = vmatprep.subr.mxu0 0.0
    %742 = vmatpush1.msra.mxu0 0.0
    %743 = vmatprep.subr.mxu0 0.0
    %744 = vmatpush1.msra.mxu0 0.0
    %745 = vmatprep.mubr.f32.mxu0 0.0
    %v746 = vand.u32 %v49, 4294901760
    %747 = vmatmul.mubr.f32.gmra.mrb[0].mxu0 %v746
    %v748 = vpop.f32.mrb[0].mxu0
    %v749 = vadd.f32 %v656, %v748
    %v750 = vpop.f32.mrb[0].mxu0
    %751 = vmatprep.mubr.f32.mxu0 0.0
    %v752 = vand.u32 %v50, 4294901760
    %753 = vmatmul.mubr.f32.gmra.mrb[0].mxu0 %v752
    %v754 = vpop.f32.mrb[0].mxu0
    %v755 = vadd.f32 %v662, %v754
    %v756 = vpop.f32.mrb[0].mxu0
    %757 = vdwg.mxu0
    %v758 = vmax.f32 %v749, 0.0
    %v759 = vmax.f32 %v755, 0.0
    %v760 = vld [vmem:[#allocation5] sm:$0xff]
    %v761 = vld [vmem:[#allocation5 + $0x8] sm:$0xff]
    %v762 = vld [vmem:[#allocation5 + $0x10] sm:$0xff]
    %v763 = vld [vmem:[#allocation5 + $0x18] sm:$0xff]
    %v764 = vld [vmem:[#allocation5 + $0x20] sm:$0xff]
    %v765 = vld [vmem:[#allocation5 + $0x28] sm:$0xff]
    %v766 = vld [vmem:[#allocation5 + $0x30] sm:$0xff]
    %v767 = vld [vmem:[#allocation5 + $0x38] sm:$0xff]
    %v768 = vld [vmem:[#allocation5 + $0x40] sm:$0xff]
    %v769 = vld [vmem:[#allocation5 + $0x48] sm:$0xff]
    %v770 = vld [vmem:[#allocation5 + $0x50] sm:$0xff]
    %v771 = vld [vmem:[#allocation5 + $0x58] sm:$0xff]
    %v772 = vld [vmem:[#allocation5 + $0x60] sm:$0xff]
    %v773 = vld [vmem:[#allocation5 + $0x68] sm:$0xff]
    %v774 = vld [vmem:[#allocation5 + $0x70] sm:$0xff]
    %v775 = vld [vmem:[#allocation5 + $0x78] sm:$0xff]
    %v776 = vld [vmem:[%s4] sm:$0x1]
    %v778 = vlaneseq
    %v779 = vshrl.u32 %v778, 7
    %v780 = vsub.s32 0, %v779
    %v781 = vrot.slane %v776, %v780
    %783 = vmatprep.subr.mxu0 0.0
    %v784 = vand.u32 %v760, 4294901760
    %785 = vmatpush1.msra.mxu0 %v784
    %786 = vmatprep.subr.mxu0 0.0
    %v787 = vand.u32 %v761, 4294901760
    %788 = vmatpush1.msra.mxu0 %v787
    %789 = vmatprep.subr.mxu0 0.0
    %v790 = vand.u32 %v762, 4294901760
    %791 = vmatpush1.msra.mxu0 %v790
    %792 = vmatprep.subr.mxu0 0.0
    %v793 = vand.u32 %v763, 4294901760
    %794 = vmatpush1.msra.mxu0 %v793
    %795 = vmatprep.subr.mxu0 0.0
    %v796 = vand.u32 %v764, 4294901760
    %797 = vmatpush1.msra.mxu0 %v796
    %798 = vmatprep.subr.mxu0 0.0
    %v799 = vand.u32 %v765, 4294901760
    %800 = vmatpush1.msra.mxu0 %v799
    %801 = vmatprep.subr.mxu0 0.0
    %v802 = vand.u32 %v766, 4294901760
    %803 = vmatpush1.msra.mxu0 %v802
    %804 = vmatprep.subr.mxu0 0.0
    %v805 = vand.u32 %v767, 4294901760
    %806 = vmatpush1.msra.mxu0 %v805
    %807 = vmatprep.subr.mxu0 0.0
    %v808 = vand.u32 %v768, 4294901760
    %809 = vmatpush1.msra.mxu0 %v808
    %810 = vmatprep.subr.mxu0 0.0
    %v811 = vand.u32 %v769, 4294901760
    %812 = vmatpush1.msra.mxu0 %v811
    %813 = vmatprep.subr.mxu0 0.0
    %v814 = vand.u32 %v770, 4294901760
    %815 = vmatpush1.msra.mxu0 %v814
    %816 = vmatprep.subr.mxu0 0.0
    %v817 = vand.u32 %v771, 4294901760
    %818 = vmatpush1.msra.mxu0 %v817
    %819 = vmatprep.subr.mxu0 0.0
    %v820 = vand.u32 %v772, 4294901760
    %821 = vmatpush1.msra.mxu0 %v820
    %822 = vmatprep.subr.mxu0 0.0
    %v823 = vand.u32 %v773, 4294901760
    %824 = vmatpush1.msra.mxu0 %v823
    %825 = vmatprep.subr.mxu0 0.0
    %v826 = vand.u32 %v774, 4294901760
    %827 = vmatpush1.msra.mxu0 %v826
    %828 = vmatprep.subr.mxu0 0.0
    %v829 = vand.u32 %v775, 4294901760
    %830 = vmatpush1.msra.mxu0 %v829
    %831 = vmatprep.subr.mxu0 0.0
    %832 = vmatpush1.msra.mxu0 0.0
    %833 = vmatprep.subr.mxu0 0.0
    %834 = vmatpush1.msra.mxu0 0.0
    %835 = vmatprep.subr.mxu0 0.0
    %836 = vmatpush1.msra.mxu0 0.0
    %837 = vmatprep.subr.mxu0 0.0
    %838 = vmatpush1.msra.mxu0 0.0
    %839 = vmatprep.subr.mxu0 0.0
    %840 = vmatpush1.msra.mxu0 0.0
    %841 = vmatprep.subr.mxu0 0.0
    %842 = vmatpush1.msra.mxu0 0.0
    %843 = vmatprep.subr.mxu0 0.0
    %844 = vmatpush1.msra.mxu0 0.0
    %845 = vmatprep.subr.mxu0 0.0
    %846 = vmatpush1.msra.mxu0 0.0
    %847 = vmatprep.subr.mxu0 0.0
    %848 = vmatpush1.msra.mxu0 0.0
    %849 = vmatprep.subr.mxu0 0.0
    %850 = vmatpush1.msra.mxu0 0.0
    %851 = vmatprep.subr.mxu0 0.0
    %852 = vmatpush1.msra.mxu0 0.0
    %853 = vmatprep.subr.mxu0 0.0
    %854 = vmatpush1.msra.mxu0 0.0
    %855 = vmatprep.subr.mxu0 0.0
    %856 = vmatpush1.msra.mxu0 0.0
    %857 = vmatprep.subr.mxu0 0.0
    %858 = vmatpush1.msra.mxu0 0.0
    %859 = vmatprep.subr.mxu0 0.0
    %860 = vmatpush1.msra.mxu0 0.0
    %861 = vmatprep.subr.mxu0 0.0
    %862 = vmatpush1.msra.mxu0 0.0
    %863 = vmatprep.mubr.f32.mxu0 0.0
    %v864 = vand.u32 %v758, 4294901760
    %v865 = vsub.f32 %v758, %v864
    %v866 = vand.u32 %v865, 4294901760
    %v867 = vsub.f32 %v865, %v866
    %v868 = vand.u32 %v867, 4294901760
    %869 = vmatmul.mubr.f32.gmra.mrb[0].mxu0 %v868
    %v870 = vpop.f32.mrb[0].mxu0
    %v871 = vadd.f32 %v781, %v870
    %v872 = vpop.f32.mrb[0].mxu0
    %873 = vmatprep.mubr.f32.mxu0 0.0
    %v874 = vand.u32 %v759, 4294901760
    %v875 = vsub.f32 %v759, %v874
    %v876 = vand.u32 %v875, 4294901760
    %v877 = vsub.f32 %v875, %v876
    %v878 = vand.u32 %v877, 4294901760
    %879 = vmatmul.mubr.f32.gmra.mrb[0].mxu0 %v878
    %v880 = vpop.f32.mrb[0].mxu0
    %v881 = vadd.f32 %v781, %v880
    %v882 = vpop.f32.mrb[0].mxu0
    %883 = vdwg.mxu0
    %884 = vmatprep.subr.mxu0 0.0
    %v885 = vand.u32 %v760, 4294901760
    %v886 = vsub.f32 %v760, %v885
    %v887 = vand.u32 %v886, 4294901760
    %v888 = vsub.f32 %v886, %v887
    %v889 = vand.u32 %v888, 4294901760
    %890 = vmatpush1.msra.mxu0 %v889
    %891 = vmatprep.subr.mxu0 0.0
    %v892 = vand.u32 %v761, 4294901760
    %v893 = vsub.f32 %v761, %v892
    %v894 = vand.u32 %v893, 4294901760
    %v895 = vsub.f32 %v893, %v894
    %v896 = vand.u32 %v895, 4294901760
    %897 = vmatpush1.msra.mxu0 %v896
    %898 = vmatprep.subr.mxu0 0.0
    %v899 = vand.u32 %v762, 4294901760
    %v900 = vsub.f32 %v762, %v899
    %v901 = vand.u32 %v900, 4294901760
    %v902 = vsub.f32 %v900, %v901
    %v903 = vand.u32 %v902, 4294901760
    %904 = vmatpush1.msra.mxu0 %v903
    %905 = vmatprep.subr.mxu0 0.0
    %v906 = vand.u32 %v763, 4294901760
    %v907 = vsub.f32 %v763, %v906
    %v908 = vand.u32 %v907, 4294901760
    %v909 = vsub.f32 %v907, %v908
    %v910 = vand.u32 %v909, 4294901760
    %911 = vmatpush1.msra.mxu0 %v910
    %912 = vmatprep.subr.mxu0 0.0
    %v913 = vand.u32 %v764, 4294901760
    %v914 = vsub.f32 %v764, %v913
    %v915 = vand.u32 %v914, 4294901760
    %v916 = vsub.f32 %v914, %v915
    %v917 = vand.u32 %v916, 4294901760
    %918 = vmatpush1.msra.mxu0 %v917
    %919 = vmatprep.subr.mxu0 0.0
    %v920 = vand.u32 %v765, 4294901760
    %v921 = vsub.f32 %v765, %v920
    %v922 = vand.u32 %v921, 4294901760
    %v923 = vsub.f32 %v921, %v922
    %v924 = vand.u32 %v923, 4294901760
    %925 = vmatpush1.msra.mxu0 %v924
    %926 = vmatprep.subr.mxu0 0.0
    %v927 = vand.u32 %v766, 4294901760
    %v928 = vsub.f32 %v766, %v927
    %v929 = vand.u32 %v928, 4294901760
    %v930 = vsub.f32 %v928, %v929
    %v931 = vand.u32 %v930, 4294901760
    %932 = vmatpush1.msra.mxu0 %v931
    %933 = vmatprep.subr.mxu0 0.0
    %v934 = vand.u32 %v767, 4294901760
    %v935 = vsub.f32 %v767, %v934
    %v936 = vand.u32 %v935, 4294901760
    %v937 = vsub.f32 %v935, %v936
    %v938 = vand.u32 %v937, 4294901760
    %939 = vmatpush1.msra.mxu0 %v938
    %940 = vmatprep.subr.mxu0 0.0
    %v941 = vand.u32 %v768, 4294901760
    %v942 = vsub.f32 %v768, %v941
    %v943 = vand.u32 %v942, 4294901760
    %v944 = vsub.f32 %v942, %v943
    %v945 = vand.u32 %v944, 4294901760
    %946 = vmatpush1.msra.mxu0 %v945
    %947 = vmatprep.subr.mxu0 0.0
    %v948 = vand.u32 %v769, 4294901760
    %v949 = vsub.f32 %v769, %v948
    %v950 = vand.u32 %v949, 4294901760
    %v951 = vsub.f32 %v949, %v950
    %v952 = vand.u32 %v951, 4294901760
    %953 = vmatpush1.msra.mxu0 %v952
    %954 = vmatprep.subr.mxu0 0.0
    %v955 = vand.u32 %v770, 4294901760
    %v956 = vsub.f32 %v770, %v955
    %v957 = vand.u32 %v956, 4294901760
    %v958 = vsub.f32 %v956, %v957
    %v959 = vand.u32 %v958, 4294901760
    %960 = vmatpush1.msra.mxu0 %v959
    %961 = vmatprep.subr.mxu0 0.0
    %v962 = vand.u32 %v771, 4294901760
    %v963 = vsub.f32 %v771, %v962
    %v964 = vand.u32 %v963, 4294901760
    %v965 = vsub.f32 %v963, %v964
    %v966 = vand.u32 %v965, 4294901760
    %967 = vmatpush1.msra.mxu0 %v966
    %968 = vmatprep.subr.mxu0 0.0
    %v969 = vand.u32 %v772, 4294901760
    %v970 = vsub.f32 %v772, %v969
    %v971 = vand.u32 %v970, 4294901760
    %v972 = vsub.f32 %v970, %v971
    %v973 = vand.u32 %v972, 4294901760
    %974 = vmatpush1.msra.mxu0 %v973
    %975 = vmatprep.subr.mxu0 0.0
    %v976 = vand.u32 %v773, 4294901760
    %v977 = vsub.f32 %v773, %v976
    %v978 = vand.u32 %v977, 4294901760
    %v979 = vsub.f32 %v977, %v978
    %v980 = vand.u32 %v979, 4294901760
    %981 = vmatpush1.msra.mxu0 %v980
    %982 = vmatprep.subr.mxu0 0.0
    %v983 = vand.u32 %v774, 4294901760
    %v984 = vsub.f32 %v774, %v983
    %v985 = vand.u32 %v984, 4294901760
    %v986 = vsub.f32 %v984, %v985
    %v987 = vand.u32 %v986, 4294901760
    %988 = vmatpush1.msra.mxu0 %v987
    %989 = vmatprep.subr.mxu0 0.0
    %v990 = vand.u32 %v775, 4294901760
    %v991 = vsub.f32 %v775, %v990
    %v992 = vand.u32 %v991, 4294901760
    %v993 = vsub.f32 %v991, %v992
    %v994 = vand.u32 %v993, 4294901760
    %995 = vmatpush1.msra.mxu0 %v994
    %996 = vmatprep.subr.mxu0 0.0
    %997 = vmatpush1.msra.mxu0 0.0
    %998 = vmatprep.subr.mxu0 0.0
    %999 = vmatpush1.msra.mxu0 0.0
    %1000 = vmatprep.subr.mxu0 0.0
    %1001 = vmatpush1.msra.mxu0 0.0
    %1002 = vmatprep.subr.mxu0 0.0
    %1003 = vmatpush1.msra.mxu0 0.0
    %1004 = vmatprep.subr.mxu0 0.0
    %1005 = vmatpush1.msra.mxu0 0.0
    %1006 = vmatprep.subr.mxu0 0.0
    %1007 = vmatpush1.msra.mxu0 0.0
    %1008 = vmatprep.subr.mxu0 0.0
    %1009 = vmatpush1.msra.mxu0 0.0
    %1010 = vmatprep.subr.mxu0 0.0
    %1011 = vmatpush1.msra.mxu0 0.0
    %1012 = vmatprep.subr.mxu0 0.0
    %1013 = vmatpush1.msra.mxu0 0.0
    %1014 = vmatprep.subr.mxu0 0.0
    %1015 = vmatpush1.msra.mxu0 0.0
    %1016 = vmatprep.subr.mxu0 0.0
    %1017 = vmatpush1.msra.mxu0 0.0
    %1018 = vmatprep.subr.mxu0 0.0
    %1019 = vmatpush1.msra.mxu0 0.0
    %1020 = vmatprep.subr.mxu0 0.0
    %1021 = vmatpush1.msra.mxu0 0.0
    %1022 = vmatprep.subr.mxu0 0.0
    %1023 = vmatpush1.msra.mxu0 0.0
    %1024 = vmatprep.subr.mxu0 0.0
    %1025 = vmatpush1.msra.mxu0 0.0
    %1026 = vmatprep.subr.mxu0 0.0
    %1027 = vmatpush1.msra.mxu0 0.0
    %1028 = vmatprep.mubr.f32.mxu0 0.0
    %v1029 = vand.u32 %v758, 4294901760
    %1030 = vmatmul.mubr.f32.gmra.mrb[0].mxu0 %v1029
    %v1031 = vpop.f32.mrb[0].mxu0
    %v1032 = vadd.f32 %v871, %v1031
    %v1033 = vpop.f32.mrb[0].mxu0
    %1034 = vmatprep.mubr.f32.mxu0 0.0
    %v1035 = vand.u32 %v759, 4294901760
    %1036 = vmatmul.mubr.f32.gmra.mrb[0].mxu0 %v1035
    %v1037 = vpop.f32.mrb[0].mxu0
    %v1038 = vadd.f32 %v881, %v1037
    %v1039 = vpop.f32.mrb[0].mxu0
    %1040 = vdwg.mxu0
    %1041 = vmatprep.subr.mxu0 0.0
    %v1042 = vand.u32 %v760, 4294901760
    %v1043 = vsub.f32 %v760, %v1042
    %1044 = vmatpush1.msra.mxu0 %v1043
    %1045 = vmatprep.subr.mxu0 0.0
    %v1046 = vand.u32 %v761, 4294901760
    %v1047 = vsub.f32 %v761, %v1046
    %1048 = vmatpush1.msra.mxu0 %v1047
    %1049 = vmatprep.subr.mxu0 0.0
    %v1050 = vand.u32 %v762, 4294901760
    %v1051 = vsub.f32 %v762, %v1050
    %1052 = vmatpush1.msra.mxu0 %v1051
    %1053 = vmatprep.subr.mxu0 0.0
    %v1054 = vand.u32 %v763, 4294901760
    %v1055 = vsub.f32 %v763, %v1054
    %1056 = vmatpush1.msra.mxu0 %v1055
    %1057 = vmatprep.subr.mxu0 0.0
    %v1058 = vand.u32 %v764, 4294901760
    %v1059 = vsub.f32 %v764, %v1058
    %1060 = vmatpush1.msra.mxu0 %v1059
    %1061 = vmatprep.subr.mxu0 0.0
    %v1062 = vand.u32 %v765, 4294901760
    %v1063 = vsub.f32 %v765, %v1062
    %1064 = vmatpush1.msra.mxu0 %v1063
    %1065 = vmatprep.subr.mxu0 0.0
    %v1066 = vand.u32 %v766, 4294901760
    %v1067 = vsub.f32 %v766, %v1066
    %1068 = vmatpush1.msra.mxu0 %v1067
    %1069 = vmatprep.subr.mxu0 0.0
    %v1070 = vand.u32 %v767, 4294901760
    %v1071 = vsub.f32 %v767, %v1070
    %1072 = vmatpush1.msra.mxu0 %v1071
    %1073 = vmatprep.subr.mxu0 0.0
    %v1074 = vand.u32 %v768, 4294901760
    %v1075 = vsub.f32 %v768, %v1074
    %1076 = vmatpush1.msra.mxu0 %v1075
    %1077 = vmatprep.subr.mxu0 0.0
    %v1078 = vand.u32 %v769, 4294901760
    %v1079 = vsub.f32 %v769, %v1078
    %1080 = vmatpush1.msra.mxu0 %v1079
    %1081 = vmatprep.subr.mxu0 0.0
    %v1082 = vand.u32 %v770, 4294901760
    %v1083 = vsub.f32 %v770, %v1082
    %1084 = vmatpush1.msra.mxu0 %v1083
    %1085 = vmatprep.subr.mxu0 0.0
    %v1086 = vand.u32 %v771, 4294901760
    %v1087 = vsub.f32 %v771, %v1086
    %1088 = vmatpush1.msra.mxu0 %v1087
    %1089 = vmatprep.subr.mxu0 0.0
    %v1090 = vand.u32 %v772, 4294901760
    %v1091 = vsub.f32 %v772, %v1090
    %1092 = vmatpush1.msra.mxu0 %v1091
    %1093 = vmatprep.subr.mxu0 0.0
    %v1094 = vand.u32 %v773, 4294901760
    %v1095 = vsub.f32 %v773, %v1094
    %1096 = vmatpush1.msra.mxu0 %v1095
    %1097 = vmatprep.subr.mxu0 0.0
    %v1098 = vand.u32 %v774, 4294901760
    %v1099 = vsub.f32 %v774, %v1098
    %1100 = vmatpush1.msra.mxu0 %v1099
    %1101 = vmatprep.subr.mxu0 0.0
    %v1102 = vand.u32 %v775, 4294901760
    %v1103 = vsub.f32 %v775, %v1102
    %1104 = vmatpush1.msra.mxu0 %v1103
    %1105 = vmatprep.subr.mxu0 0.0
    %1106 = vmatpush1.msra.mxu0 0.0
    %1107 = vmatprep.subr.mxu0 0.0
    %1108 = vmatpush1.msra.mxu0 0.0
    %1109 = vmatprep.subr.mxu0 0.0
    %1110 = vmatpush1.msra.mxu0 0.0
    %1111 = vmatprep.subr.mxu0 0.0
    %1112 = vmatpush1.msra.mxu0 0.0
    %1113 = vmatprep.subr.mxu0 0.0
    %1114 = vmatpush1.msra.mxu0 0.0
    %1115 = vmatprep.subr.mxu0 0.0
    %1116 = vmatpush1.msra.mxu0 0.0
    %1117 = vmatprep.subr.mxu0 0.0
    %1118 = vmatpush1.msra.mxu0 0.0
    %1119 = vmatprep.subr.mxu0 0.0
    %1120 = vmatpush1.msra.mxu0 0.0
    %1121 = vmatprep.subr.mxu0 0.0
    %1122 = vmatpush1.msra.mxu0 0.0
    %1123 = vmatprep.subr.mxu0 0.0
    %1124 = vmatpush1.msra.mxu0 0.0
    %1125 = vmatprep.subr.mxu0 0.0
    %1126 = vmatpush1.msra.mxu0 0.0
    %1127 = vmatprep.subr.mxu0 0.0
    %1128 = vmatpush1.msra.mxu0 0.0
    %1129 = vmatprep.subr.mxu0 0.0
    %1130 = vmatpush1.msra.mxu0 0.0
    %1131 = vmatprep.subr.mxu0 0.0
    %1132 = vmatpush1.msra.mxu0 0.0
    %1133 = vmatprep.subr.mxu0 0.0
    %1134 = vmatpush1.msra.mxu0 0.0
    %1135 = vmatprep.subr.mxu0 0.0
    %1136 = vmatpush1.msra.mxu0 0.0
    %1137 = vmatprep.mubr.f32.mxu0 0.0
    %v1138 = vand.u32 %v758, 4294901760
    %v1139 = vsub.f32 %v758, %v1138
    %1140 = vmatmul.mubr.f32.gmra.mrb[0].mxu0 %v1139
    %v1141 = vpop.f32.mrb[0].mxu0
    %v1142 = vadd.f32 %v1032, %v1141
    %v1143 = vpop.f32.mrb[0].mxu0
    %1144 = vmatprep.mubr.f32.mxu0 0.0
    %v1145 = vand.u32 %v759, 4294901760
    %v1146 = vsub.f32 %v759, %v1145
    %1147 = vmatmul.mubr.f32.gmra.mrb[0].mxu0 %v1146
    %v1148 = vpop.f32.mrb[0].mxu0
    %v1149 = vadd.f32 %v1038, %v1148
    %v1150 = vpop.f32.mrb[0].mxu0
    %1151 = vdwg.mxu0
    %1152 = vmatprep.subr.mxu0 0.0
    %v1153 = vand.u32 %v760, 4294901760
    %1154 = vmatpush1.msra.mxu0 %v1153
    %1155 = vmatprep.subr.mxu0 0.0
    %v1156 = vand.u32 %v761, 4294901760
    %1157 = vmatpush1.msra.mxu0 %v1156
    %1158 = vmatprep.subr.mxu0 0.0
    %v1159 = vand.u32 %v762, 4294901760
    %1160 = vmatpush1.msra.mxu0 %v1159
    %1161 = vmatprep.subr.mxu0 0.0
    %v1162 = vand.u32 %v763, 4294901760
    %1163 = vmatpush1.msra.mxu0 %v1162
    %1164 = vmatprep.subr.mxu0 0.0
    %v1165 = vand.u32 %v764, 4294901760
    %1166 = vmatpush1.msra.mxu0 %v1165
    %1167 = vmatprep.subr.mxu0 0.0
    %v1168 = vand.u32 %v765, 4294901760
    %1169 = vmatpush1.msra.mxu0 %v1168
    %1170 = vmatprep.subr.mxu0 0.0
    %v1171 = vand.u32 %v766, 4294901760
    %1172 = vmatpush1.msra.mxu0 %v1171
    %1173 = vmatprep.subr.mxu0 0.0
    %v1174 = vand.u32 %v767, 4294901760
    %1175 = vmatpush1.msra.mxu0 %v1174
    %1176 = vmatprep.subr.mxu0 0.0
    %v1177 = vand.u32 %v768, 4294901760
    %1178 = vmatpush1.msra.mxu0 %v1177
    %1179 = vmatprep.subr.mxu0 0.0
    %v1180 = vand.u32 %v769, 4294901760
    %1181 = vmatpush1.msra.mxu0 %v1180
    %1182 = vmatprep.subr.mxu0 0.0
    %v1183 = vand.u32 %v770, 4294901760
    %1184 = vmatpush1.msra.mxu0 %v1183
    %1185 = vmatprep.subr.mxu0 0.0
    %v1186 = vand.u32 %v771, 4294901760
    %1187 = vmatpush1.msra.mxu0 %v1186
    %1188 = vmatprep.subr.mxu0 0.0
    %v1189 = vand.u32 %v772, 4294901760
    %1190 = vmatpush1.msra.mxu0 %v1189
    %1191 = vmatprep.subr.mxu0 0.0
    %v1192 = vand.u32 %v773, 4294901760
    %1193 = vmatpush1.msra.mxu0 %v1192
    %1194 = vmatprep.subr.mxu0 0.0
    %v1195 = vand.u32 %v774, 4294901760
    %1196 = vmatpush1.msra.mxu0 %v1195
    %1197 = vmatprep.subr.mxu0 0.0
    %v1198 = vand.u32 %v775, 4294901760
    %1199 = vmatpush1.msra.mxu0 %v1198
    %1200 = vmatprep.subr.mxu0 0.0
    %1201 = vmatpush1.msra.mxu0 0.0
    %1202 = vmatprep.subr.mxu0 0.0
    %1203 = vmatpush1.msra.mxu0 0.0
    %1204 = vmatprep.subr.mxu0 0.0
    %1205 = vmatpush1.msra.mxu0 0.0
    %1206 = vmatprep.subr.mxu0 0.0
    %1207 = vmatpush1.msra.mxu0 0.0
    %1208 = vmatprep.subr.mxu0 0.0
    %1209 = vmatpush1.msra.mxu0 0.0
    %1210 = vmatprep.subr.mxu0 0.0
    %1211 = vmatpush1.msra.mxu0 0.0
    %1212 = vmatprep.subr.mxu0 0.0
    %1213 = vmatpush1.msra.mxu0 0.0
    %1214 = vmatprep.subr.mxu0 0.0
    %1215 = vmatpush1.msra.mxu0 0.0
    %1216 = vmatprep.subr.mxu0 0.0
    %1217 = vmatpush1.msra.mxu0 0.0
    %1218 = vmatprep.subr.mxu0 0.0
    %1219 = vmatpush1.msra.mxu0 0.0
    %1220 = vmatprep.subr.mxu0 0.0
    %1221 = vmatpush1.msra.mxu0 0.0
    %1222 = vmatprep.subr.mxu0 0.0
    %1223 = vmatpush1.msra.mxu0 0.0
    %1224 = vmatprep.subr.mxu0 0.0
    %1225 = vmatpush1.msra.mxu0 0.0
    %1226 = vmatprep.subr.mxu0 0.0
    %1227 = vmatpush1.msra.mxu0 0.0
    %1228 = vmatprep.subr.mxu0 0.0
    %1229 = vmatpush1.msra.mxu0 0.0
    %1230 = vmatprep.subr.mxu0 0.0
    %1231 = vmatpush1.msra.mxu0 0.0
    %1232 = vmatprep.mubr.f32.mxu0 0.0
    %v1233 = vand.u32 %v758, 4294901760
    %v1234 = vsub.f32 %v758, %v1233
    %v1235 = vand.u32 %v1234, 4294901760
    %1236 = vmatmul.mubr.f32.gmra.mrb[0].mxu0 %v1235
    %v1237 = vpop.f32.mrb[0].mxu0
    %v1238 = vadd.f32 %v1142, %v1237
    %v1239 = vpop.f32.mrb[0].mxu0
    %1240 = vmatprep.mubr.f32.mxu0 0.0
    %v1241 = vand.u32 %v759, 4294901760
    %v1242 = vsub.f32 %v759, %v1241
    %v1243 = vand.u32 %v1242, 4294901760
    %1244 = vmatmul.mubr.f32.gmra.mrb[0].mxu0 %v1243
    %v1245 = vpop.f32.mrb[0].mxu0
    %v1246 = vadd.f32 %v1149, %v1245
    %v1247 = vpop.f32.mrb[0].mxu0
    %1248 = vdwg.mxu0
    %1249 = vmatprep.subr.mxu0 0.0
    %v1250 = vand.u32 %v760, 4294901760
    %v1251 = vsub.f32 %v760, %v1250
    %v1252 = vand.u32 %v1251, 4294901760
    %1253 = vmatpush1.msra.mxu0 %v1252
    %1254 = vmatprep.subr.mxu0 0.0
    %v1255 = vand.u32 %v761, 4294901760
    %v1256 = vsub.f32 %v761, %v1255
    %v1257 = vand.u32 %v1256, 4294901760
    %1258 = vmatpush1.msra.mxu0 %v1257
    %1259 = vmatprep.subr.mxu0 0.0
    %v1260 = vand.u32 %v762, 4294901760
    %v1261 = vsub.f32 %v762, %v1260
    %v1262 = vand.u32 %v1261, 4294901760
    %1263 = vmatpush1.msra.mxu0 %v1262
    %1264 = vmatprep.subr.mxu0 0.0
    %v1265 = vand.u32 %v763, 4294901760
    %v1266 = vsub.f32 %v763, %v1265
    %v1267 = vand.u32 %v1266, 4294901760
    %1268 = vmatpush1.msra.mxu0 %v1267
    %1269 = vmatprep.subr.mxu0 0.0
    %v1270 = vand.u32 %v764, 4294901760
    %v1271 = vsub.f32 %v764, %v1270
    %v1272 = vand.u32 %v1271, 4294901760
    %1273 = vmatpush1.msra.mxu0 %v1272
    %1274 = vmatprep.subr.mxu0 0.0
    %v1275 = vand.u32 %v765, 4294901760
    %v1276 = vsub.f32 %v765, %v1275
    %v1277 = vand.u32 %v1276, 4294901760
    %1278 = vmatpush1.msra.mxu0 %v1277
    %1279 = vmatprep.subr.mxu0 0.0
    %v1280 = vand.u32 %v766, 4294901760
    %v1281 = vsub.f32 %v766, %v1280
    %v1282 = vand.u32 %v1281, 4294901760
    %1283 = vmatpush1.msra.mxu0 %v1282
    %1284 = vmatprep.subr.mxu0 0.0
    %v1285 = vand.u32 %v767, 4294901760
    %v1286 = vsub.f32 %v767, %v1285
    %v1287 = vand.u32 %v1286, 4294901760
    %1288 = vmatpush1.msra.mxu0 %v1287
    %1289 = vmatprep.subr.mxu0 0.0
    %v1290 = vand.u32 %v768, 4294901760
    %v1291 = vsub.f32 %v768, %v1290
    %v1292 = vand.u32 %v1291, 4294901760
    %1293 = vmatpush1.msra.mxu0 %v1292
    %1294 = vmatprep.subr.mxu0 0.0
    %v1295 = vand.u32 %v769, 4294901760
    %v1296 = vsub.f32 %v769, %v1295
    %v1297 = vand.u32 %v1296, 4294901760
    %1298 = vmatpush1.msra.mxu0 %v1297
    %1299 = vmatprep.subr.mxu0 0.0
    %v1300 = vand.u32 %v770, 4294901760
    %v1301 = vsub.f32 %v770, %v1300
    %v1302 = vand.u32 %v1301, 4294901760
    %1303 = vmatpush1.msra.mxu0 %v1302
    %1304 = vmatprep.subr.mxu0 0.0
    %v1305 = vand.u32 %v771, 4294901760
    %v1306 = vsub.f32 %v771, %v1305
    %v1307 = vand.u32 %v1306, 4294901760
    %1308 = vmatpush1.msra.mxu0 %v1307
    %1309 = vmatprep.subr.mxu0 0.0
    %v1310 = vand.u32 %v772, 4294901760
    %v1311 = vsub.f32 %v772, %v1310
    %v1312 = vand.u32 %v1311, 4294901760
    %1313 = vmatpush1.msra.mxu0 %v1312
    %1314 = vmatprep.subr.mxu0 0.0
    %v1315 = vand.u32 %v773, 4294901760
    %v1316 = vsub.f32 %v773, %v1315
    %v1317 = vand.u32 %v1316, 4294901760
    %1318 = vmatpush1.msra.mxu0 %v1317
    %1319 = vmatprep.subr.mxu0 0.0
    %v1320 = vand.u32 %v774, 4294901760
    %v1321 = vsub.f32 %v774, %v1320
    %v1322 = vand.u32 %v1321, 4294901760
    %1323 = vmatpush1.msra.mxu0 %v1322
    %1324 = vmatprep.subr.mxu0 0.0
    %v1325 = vand.u32 %v775, 4294901760
    %v1326 = vsub.f32 %v775, %v1325
    %v1327 = vand.u32 %v1326, 4294901760
    %1328 = vmatpush1.msra.mxu0 %v1327
    %1329 = vmatprep.subr.mxu0 0.0
    %1330 = vmatpush1.msra.mxu0 0.0
    %1331 = vmatprep.subr.mxu0 0.0
    %1332 = vmatpush1.msra.mxu0 0.0
    %1333 = vmatprep.subr.mxu0 0.0
    %1334 = vmatpush1.msra.mxu0 0.0
    %1335 = vmatprep.subr.mxu0 0.0
    %1336 = vmatpush1.msra.mxu0 0.0
    %1337 = vmatprep.subr.mxu0 0.0
    %1338 = vmatpush1.msra.mxu0 0.0
    %1339 = vmatprep.subr.mxu0 0.0
    %1340 = vmatpush1.msra.mxu0 0.0
    %1341 = vmatprep.subr.mxu0 0.0
    %1342 = vmatpush1.msra.mxu0 0.0
    %1343 = vmatprep.subr.mxu0 0.0
    %1344 = vmatpush1.msra.mxu0 0.0
    %1345 = vmatprep.subr.mxu0 0.0
    %1346 = vmatpush1.msra.mxu0 0.0
    %1347 = vmatprep.subr.mxu0 0.0
    %1348 = vmatpush1.msra.mxu0 0.0
    %1349 = vmatprep.subr.mxu0 0.0
    %1350 = vmatpush1.msra.mxu0 0.0
    %1351 = vmatprep.subr.mxu0 0.0
    %1352 = vmatpush1.msra.mxu0 0.0
    %1353 = vmatprep.subr.mxu0 0.0
    %1354 = vmatpush1.msra.mxu0 0.0
    %1355 = vmatprep.subr.mxu0 0.0
    %1356 = vmatpush1.msra.mxu0 0.0
    %1357 = vmatprep.subr.mxu0 0.0
    %1358 = vmatpush1.msra.mxu0 0.0
    %1359 = vmatprep.subr.mxu0 0.0
    %1360 = vmatpush1.msra.mxu0 0.0
    %1361 = vmatprep.mubr.f32.mxu0 0.0
    %v1362 = vand.u32 %v758, 4294901760
    %1363 = vmatmul.mubr.f32.gmra.mrb[0].mxu0 %v1362
    %v1364 = vpop.f32.mrb[0].mxu0
    %v1365 = vadd.f32 %v1238, %v1364
    %v1366 = vpop.f32.mrb[0].mxu0
    %1367 = vmatprep.mubr.f32.mxu0 0.0
    %v1368 = vand.u32 %v759, 4294901760
    %1369 = vmatmul.mubr.f32.gmra.mrb[0].mxu0 %v1368
    %v1370 = vpop.f32.mrb[0].mxu0
    %v1371 = vadd.f32 %v1246, %v1370
    %v1372 = vpop.f32.mrb[0].mxu0
    %1373 = vdwg.mxu0
    %1374 = vmatprep.subr.mxu0 0.0
    %v1375 = vand.u32 %v760, 4294901760
    %1376 = vmatpush1.msra.mxu0 %v1375
    %1377 = vmatprep.subr.mxu0 0.0
    %v1378 = vand.u32 %v761, 4294901760
    %1379 = vmatpush1.msra.mxu0 %v1378
    %1380 = vmatprep.subr.mxu0 0.0
    %v1381 = vand.u32 %v762, 4294901760
    %1382 = vmatpush1.msra.mxu0 %v1381
    %1383 = vmatprep.subr.mxu0 0.0
    %v1384 = vand.u32 %v763, 4294901760
    %1385 = vmatpush1.msra.mxu0 %v1384
    %1386 = vmatprep.subr.mxu0 0.0
    %v1387 = vand.u32 %v764, 4294901760
    %1388 = vmatpush1.msra.mxu0 %v1387
    %1389 = vmatprep.subr.mxu0 0.0
    %v1390 = vand.u32 %v765, 4294901760
    %1391 = vmatpush1.msra.mxu0 %v1390
    %1392 = vmatprep.subr.mxu0 0.0
    %v1393 = vand.u32 %v766, 4294901760
    %1394 = vmatpush1.msra.mxu0 %v1393
    %1395 = vmatprep.subr.mxu0 0.0
    %v1396 = vand.u32 %v767, 4294901760
    %1397 = vmatpush1.msra.mxu0 %v1396
    %1398 = vmatprep.subr.mxu0 0.0
    %v1399 = vand.u32 %v768, 4294901760
    %1400 = vmatpush1.msra.mxu0 %v1399
    %1401 = vmatprep.subr.mxu0 0.0
    %v1402 = vand.u32 %v769, 4294901760
    %1403 = vmatpush1.msra.mxu0 %v1402
    %1404 = vmatprep.subr.mxu0 0.0
    %v1405 = vand.u32 %v770, 4294901760
    %1406 = vmatpush1.msra.mxu0 %v1405
    %1407 = vmatprep.subr.mxu0 0.0
    %v1408 = vand.u32 %v771, 4294901760
    %1409 = vmatpush1.msra.mxu0 %v1408
    %1410 = vmatprep.subr.mxu0 0.0
    %v1411 = vand.u32 %v772, 4294901760
    %1412 = vmatpush1.msra.mxu0 %v1411
    %1413 = vmatprep.subr.mxu0 0.0
    %v1414 = vand.u32 %v773, 4294901760
    %1415 = vmatpush1.msra.mxu0 %v1414
    %1416 = vmatprep.subr.mxu0 0.0
    %v1417 = vand.u32 %v774, 4294901760
    %1418 = vmatpush1.msra.mxu0 %v1417
    %1419 = vmatprep.subr.mxu0 0.0
    %v1420 = vand.u32 %v775, 4294901760
    %1421 = vmatpush1.msra.mxu0 %v1420
    %1422 = vmatprep.subr.mxu0 0.0
    %1423 = vmatpush1.msra.mxu0 0.0
    %1424 = vmatprep.subr.mxu0 0.0
    %1425 = vmatpush1.msra.mxu0 0.0
    %1426 = vmatprep.subr.mxu0 0.0
    %1427 = vmatpush1.msra.mxu0 0.0
    %1428 = vmatprep.subr.mxu0 0.0
    %1429 = vmatpush1.msra.mxu0 0.0
    %1430 = vmatprep.subr.mxu0 0.0
    %1431 = vmatpush1.msra.mxu0 0.0
    %1432 = vmatprep.subr.mxu0 0.0
    %1433 = vmatpush1.msra.mxu0 0.0
    %1434 = vmatprep.subr.mxu0 0.0
    %1435 = vmatpush1.msra.mxu0 0.0
    %1436 = vmatprep.subr.mxu0 0.0
    %1437 = vmatpush1.msra.mxu0 0.0
    %1438 = vmatprep.subr.mxu0 0.0
    %1439 = vmatpush1.msra.mxu0 0.0
    %1440 = vmatprep.subr.mxu0 0.0
    %1441 = vmatpush1.msra.mxu0 0.0
    %1442 = vmatprep.subr.mxu0 0.0
    %1443 = vmatpush1.msra.mxu0 0.0
    %1444 = vmatprep.subr.mxu0 0.0
    %1445 = vmatpush1.msra.mxu0 0.0
    %1446 = vmatprep.subr.mxu0 0.0
    %1447 = vmatpush1.msra.mxu0 0.0
    %1448 = vmatprep.subr.mxu0 0.0
    %1449 = vmatpush1.msra.mxu0 0.0
    %1450 = vmatprep.subr.mxu0 0.0
    %1451 = vmatpush1.msra.mxu0 0.0
    %1452 = vmatprep.subr.mxu0 0.0
    %1453 = vmatpush1.msra.mxu0 0.0
    %1454 = vmatprep.mubr.f32.mxu0 0.0
    %v1455 = vand.u32 %v758, 4294901760
    %1456 = vmatmul.mubr.f32.gmra.mrb[0].mxu0 %v1455
    %v1457 = vpop.f32.mrb[0].mxu0
    %v1458 = vadd.f32 %v1365, %v1457
    %v1459 = vpop.f32.mrb[0].mxu0
    %1460 = vmatprep.mubr.f32.mxu0 0.0
    %v1461 = vand.u32 %v759, 4294901760
    %1462 = vmatmul.mubr.f32.gmra.mrb[0].mxu0 %v1461
    %v1463 = vpop.f32.mrb[0].mxu0
    %v1464 = vadd.f32 %v1371, %v1463
    %v1465 = vpop.f32.mrb[0].mxu0
    %1466 = vdwg.mxu0
    %1467 = vst [vmem:[#allocation7] sm:$0xff] %v1458
    %1468 = vst [vmem:[#allocation7 + $0x8] sm:$0xff] %v1464
    // Predicated region
    $region30: #{_mlp_forward_padded.1} parent=1 // pred_check
      _
    $region31: #{_mlp_forward_padded.1} parent=1 // pred_check_branch
      %1470 = sbr.rel (0) target = $region33
    $region32: #{_mlp_forward_padded.1} parent=1 // pred_region
      %s1472 = ssub.s32 256, 256
      %1473 = vsyncadd [#allocation4], %s1472
      %s1474 = sshll.u32 [#allocation7], 4
      %s1475 = int_to_ptr.vmem [resolvable:$true] %s1474
      %1480 = dma.vmem_to_hbm [thread:$0]  %s1475, 256, %s5, [#allocation4], 128, 128, 8
    $region33: #{_mlp_forward_padded.1} parent=1 // pred_fallthru
      _
    // Predicated region
    $region34: #{_mlp_forward_padded.1} parent=1 // pred_check
      _
    $region35: #{_mlp_forward_padded.1} parent=1 // pred_check_branch
      %1482 = sbr.rel (0) target = $region37
    $region36: #{_mlp_forward_padded.1} parent=1 // pred_region
      %1483 = dma.done [#allocation4], 256
    $region37: #{_mlp_forward_padded.1} parent=1 // pred_fallthru
      _
    %1484 = vsyncpa [#allocation3], 1
    %1485 = vsyncpa [#allocation6], 1
    %1486 = vsyncpa [#allocation4], 1

</llo_original>
